<compile_context>
chip_gen: v6e
topology: v6e:2x2x1
jax: 0.10.0
libtpu: 0.0.40
codegen_flags: <defaults>
</compile_context>

<pallas_src>
import functools

import jax
import jax.numpy as jnp
import numpy as np
from jax.experimental import pallas as pl
from jax.experimental.pallas import tpu as pltpu

_LANE = 128
# Requested scoped-VMEM cap: fits v7x (64 MiB physical) with headroom; can be
# raised towards ~100 MiB on v5e/v6e for larger edge tiles.
_VMEM_LIMIT = 48 * 1024 * 1024
_E_TILE_DEFAULT = 256      # edges per tile (multiple of 128)
_N_TILE_DEFAULT = 128      # nodes per tile (multiple of 8)


def _round_up(v, m):
    return ((v + m - 1) // m) * m


def _pad2(a, rows, cols):
    a = jnp.asarray(a, jnp.float32)
    out = jnp.zeros((rows, cols), jnp.float32)
    return out.at[:a.shape[0], :a.shape[1]].set(a)


# --------------------------------------------------------------------------
# Kernel 1: per-edge message MLP (gather + msg_fn)
# --------------------------------------------------------------------------
def _msg_kernel(src_ref, dst_ref,                               # SMEM (prefetch)
                feat_ref, w1i_ref, w1j_ref, b1_ref, w2_ref, b2_ref,
                msg_ref,                                        # output tile
                xi_buf, xj_buf):                                # VMEM scratch
    f32 = jnp.float32
    e_tile = xi_buf.shape[0]
    base = pl.program_id(0) * e_tile

    # Row gather driven by SMEM indices: x_i = feat[dst], x_j = feat[src].
    # (Padded edges point at node 0; their messages are masked in kernel 2.)
    def gather(e, carry):
        d_idx = dst_ref[base + e]
        s_idx = src_ref[base + e]
        xi_buf[pl.ds(e, 1), :] = feat_ref[pl.ds(d_idx, 1), :]
        xj_buf[pl.ds(e, 1), :] = feat_ref[pl.ds(s_idx, 1), :]
        return carry

    jax.lax.fori_loop(0, e_tile, gather, 0)

    # msg_fn: relu([feat_i | feat_j] @ W1 + b1) @ W2 + b2, with W1 kept as the
    # two row blocks W1_i / W1_j (the concat is folded into the sum).
    h = (jnp.dot(xi_buf[...], w1i_ref[...], preferred_element_type=f32)
         + jnp.dot(xj_buf[...], w1j_ref[...], preferred_element_type=f32)
         + b1_ref[...])
    h = jnp.maximum(h, 0.0)
    msg_ref[...] = jnp.dot(h, w2_ref[...], preferred_element_type=f32) + b2_ref[...]


# --------------------------------------------------------------------------
# Kernel 2: scatter-add over dst (reduction over edge tiles) + update MLP
# --------------------------------------------------------------------------
def _agg_update_kernel(dst_ref, msg_ref, feat_ref,
                       wux_ref, wum_ref, bu1_ref, wu2_ref, bu2_ref,
                       out_ref, acc_ref, *,
                       n_edges, e_padded, e_tile, n_tile):
    f32 = jnp.float32
    ni = pl.program_id(0)
    ei = pl.program_id(1)

    @pl.when(ei == 0)
    def _init():
        acc_ref[...] = jnp.zeros_like(acc_ref)

    # Transposed one-hot built directly per (n_tile, e_tile) block:
    # sel[n, e] = 1 iff dst[e] == global node id n (and e is a real edge).
    node_ids = ni * n_tile + jax.lax.broadcasted_iota(jnp.int32, (n_tile, e_tile), 0)
    sel = node_ids == dst_ref[...]                       # dst_ref is (1, e_tile)
    if e_padded != n_edges:                              # mask padded edges (static)
        edge_ids = ei * e_tile + jax.lax.broadcasted_iota(
            jnp.int32, (n_tile, e_tile), 1)
        sel = jnp.logical_and(sel, edge_ids < n_edges)
    acc_ref[...] += jnp.dot(sel.astype(f32), msg_ref[...],
                            preferred_element_type=f32)

    @pl.when(ei == pl.num_programs(1) - 1)
    def _finalize():
        # update_fn on cat([x, agg], -1); wu_x rows for the id/pad columns of
        # the node slab are zero, so feat @ wu_x == x @ wu_x exactly.
        uh = (jnp.dot(feat_ref[...], wux_ref[...], preferred_element_type=f32)
              + jnp.dot(acc_ref[...], wum_ref[...], preferred_element_type=f32)
              + bu1_ref[...])
        uh = jnp.maximum(uh, 0.0)
        out_ref[...] = (jnp.dot(uh, wu2_ref[...], preferred_element_type=f32)
                        + bu2_ref[...])


# --------------------------------------------------------------------------
# Wrapper
# --------------------------------------------------------------------------
def gsn_sparse_forward(x, edge_index, identifiers, degrees, params,
                       *, e_tile=_E_TILE_DEFAULT, n_tile=_N_TILE_DEFAULT):
    f32 = jnp.float32
    x = x if x.ndim > 1 else x[:, None]
    degrees = degrees if degrees.ndim > 1 else degrees[:, None]
    x = jnp.concatenate([x, degrees], axis=-1).astype(f32)   # degree_as_tag+retain
    ids = identifiers.astype(f32)

    N, d_in = x.shape
    d_id = ids.shape[1]
    E = edge_index.shape[1]
    d_h = params["w2"].shape[0]
    d_msg = params["w2"].shape[1]
    d_up = params["wu2"].shape[1]

    # lane-dense padded dims
    d_feat = d_in + d_id
    d_feat_p = _round_up(d_feat, _LANE)
    d_h_p = _round_up(d_h, _LANE)
    d_msg_p = _round_up(d_msg, _LANE)
    d_up_p = _round_up(d_up, _LANE)

    n_tile = min(n_tile, _round_up(N, 8))
    e_tile = min(e_tile, _round_up(E, _LANE))
    N_p = _round_up(N, n_tile)
    E_p = _round_up(E, e_tile)

    # node slab [x | identifiers | 0-pad]; padded node rows are zero.
    feat = (jnp.zeros((N_p, d_feat_p), f32)
            .at[:N, :d_in].set(x)
            .at[:N, d_in:d_feat].set(ids))

    # merged + zero-padded weights (padding rows/cols are zero => exact math)
    w1i = _pad2(jnp.concatenate([params["w1_xi"], params["w1_idi"]], 0), d_feat_p, d_h_p)
    w1j = _pad2(jnp.concatenate([params["w1_xj"], params["w1_idj"]], 0), d_feat_p, d_h_p)
    b1 = _pad2(params["b1"], 1, d_h_p)
    w2 = _pad2(params["w2"], d_h_p, d_msg_p)
    b2 = _pad2(params["b2"], 1, d_msg_p)
    wux = _pad2(params["wu_x"], d_feat_p, d_h_p)     # id/pad rows stay zero
    wum = _pad2(params["wu_m"], d_msg_p, d_h_p)
    bu1 = _pad2(params["bu1"], 1, d_h_p)
    wu2 = _pad2(params["wu2"], d_h_p, d_up_p)
    bu2 = _pad2(params["bu2"], 1, d_up_p)

    # int32 edge endpoints; padded edges point at node 0 (masked in kernel 2).
    src = jnp.zeros((E_p,), jnp.int32).at[:E].set(edge_index[0].astype(jnp.int32))
    dst = jnp.zeros((E_p,), jnp.int32).at[:E].set(edge_index[1].astype(jnp.int32))
    dst_row = dst[None, :]                           # [1, E_p], lane-major

    # ---------------- kernel 1: messages ----------------
    n_etiles = E_p // e_tile
    msg_cost = pl.CostEstimate(
        flops=2 * E_p * d_h_p * (2 * d_feat_p + d_msg_p),
        transcendentals=0,
        bytes_accessed=4 * (N_p * d_feat_p + 2 * d_feat_p * d_h_p
                            + d_h_p * d_msg_p + E_p * d_msg_p + 2 * E_p))
    msgs = pl.pallas_call(
        _msg_kernel,
        out_shape=jax.ShapeDtypeStruct((E_p, d_msg_p), f32),
        grid_spec=pltpu.PrefetchScalarGridSpec(
            num_scalar_prefetch=2,
            grid=(n_etiles,),
            in_specs=[
                pl.BlockSpec((N_p, d_feat_p), lambda ei, *_: (0, 0)),    # node slab
                pl.BlockSpec((d_feat_p, d_h_p), lambda ei, *_: (0, 0)),  # w1_i
                pl.BlockSpec((d_feat_p, d_h_p), lambda ei, *_: (0, 0)),  # w1_j
                pl.BlockSpec((1, d_h_p), lambda ei, *_: (0, 0)),         # b1
                pl.BlockSpec((d_h_p, d_msg_p), lambda ei, *_: (0, 0)),   # w2
                pl.BlockSpec((1, d_msg_p), lambda ei, *_: (0, 0)),       # b2
            ],
            out_specs=pl.BlockSpec((e_tile, d_msg_p), lambda ei, *_: (ei, 0)),
            scratch_shapes=[pltpu.VMEM((e_tile, d_feat_p), f32),
                            pltpu.VMEM((e_tile, d_feat_p), f32)]),
        compiler_params=pltpu.CompilerParams(
            dimension_semantics=("parallel",),
            vmem_limit_bytes=_VMEM_LIMIT),
        cost_estimate=msg_cost,
    )(src, dst, feat, w1i, w1j, b1, w2, b2)

    # ---------------- kernel 2: scatter-add + update ----------------
    n_ntiles = N_p // n_tile
    upd_cost = pl.CostEstimate(
        flops=2 * N_p * E_p * d_msg_p
              + 2 * N_p * d_h_p * (d_feat_p + d_msg_p + d_up_p),
        transcendentals=0,
        bytes_accessed=4 * (E_p + E_p * d_msg_p + N_p * d_feat_p
                            + d_feat_p * d_h_p + d_msg_p * d_h_p
                            + d_h_p * d_up_p + N_p * d_up_p))
    kernel_b = functools.partial(_agg_update_kernel, n_edges=E, e_padded=E_p,
                                 e_tile=e_tile, n_tile=n_tile)
    out = pl.pallas_call(
        kernel_b,
        out_shape=jax.ShapeDtypeStruct((N_p, d_up_p), f32),
        grid=(n_ntiles, n_etiles),
        in_specs=[
            pl.BlockSpec((1, e_tile), lambda ni, ei: (0, ei)),         # dst ids
            pl.BlockSpec((e_tile, d_msg_p), lambda ni, ei: (ei, 0)),   # messages
            pl.BlockSpec((n_tile, d_feat_p), lambda ni, ei: (ni, 0)),  # node slab
            pl.BlockSpec((d_feat_p, d_h_p), lambda ni, ei: (0, 0)),    # wu_x
            pl.BlockSpec((d_msg_p, d_h_p), lambda ni, ei: (0, 0)),     # wu_m
            pl.BlockSpec((1, d_h_p), lambda ni, ei: (0, 0)),           # bu1
            pl.BlockSpec((d_h_p, d_up_p), lambda ni, ei: (0, 0)),      # wu2
            pl.BlockSpec((1, d_up_p), lambda ni, ei: (0, 0)),          # bu2
        ],
        out_specs=pl.BlockSpec((n_tile, d_up_p), lambda ni, ei: (ni, 0)),
        scratch_shapes=[pltpu.VMEM((n_tile, d_msg_p), f32)],
        compiler_params=pltpu.CompilerParams(
            dimension_semantics=("parallel", "arbitrary"),
            vmem_limit_bytes=_VMEM_LIMIT),
        cost_estimate=upd_cost,
    )(dst_row, msgs, feat, wux, wum, bu1, wu2, bu2)

    return out[:N, :d_up]
    # TODO(synk): for graphs whose node slab exceeds VMEM, stream feat from
    # HBM (memory_space=pl.ANY + per-row async-copy gather) instead of keeping
    # the whole slab resident.


# --------------------------------------------------------------------------
# Pure-JAX reference (PyTorch forward semantics) and parameter init
# --------------------------------------------------------------------------
def gsn_sparse_reference(x, edge_index, identifiers, degrees, params):
    x = x if x.ndim > 1 else x[:, None]
    degrees = degrees if degrees.ndim > 1 else degrees[:, None]
    x = jnp.concatenate([x, degrees], axis=-1).astype(jnp.float32)
    src, dst = edge_index[0], edge_index[1]
    x_i, x_j = x[dst], x[src]
    id_i, id_j = identifiers[dst], identifiers[src]
    h = (x_i @ params["w1_xi"] + x_j @ params["w1_xj"]
         + id_i @ params["w1_idi"] + id_j @ params["w1_idj"] + params["b1"])
    msg = jnp.maximum(h, 0.0) @ params["w2"] + params["b2"]
    agg = jnp.zeros((x.shape[0], msg.shape[1]), jnp.float32).at[dst].add(msg)
    uh = x @ params["wu_x"] + agg @ params["wu_m"] + params["bu1"]
    return jnp.maximum(uh, 0.0) @ params["wu2"] + params["bu2"]


def init_params(key, d_in, d_id, d_msg, d_up, d_h):
    ks = jax.random.split(key, 12)
    msg_in = 2 * (d_in + d_id)          # id_scope='global', msg_kind='general'
    upd_in = d_in + d_msg

    def lin(k, fan_in, shape):
        return jax.random.normal(k, shape, jnp.float32) / np.sqrt(fan_in)

    return dict(
        w1_xi=lin(ks[0], msg_in, (d_in, d_h)),
        w1_xj=lin(ks[1], msg_in, (d_in, d_h)),
        w1_idi=lin(ks[2], msg_in, (d_id, d_h)),
        w1_idj=lin(ks[3], msg_in, (d_id, d_h)),
        b1=lin(ks[4], msg_in, (1, d_h)),
        w2=lin(ks[5], d_h, (d_h, d_msg)),
        b2=lin(ks[6], d_h, (1, d_msg)),
        wu_x=lin(ks[7], upd_in, (d_in, d_h)),
        wu_m=lin(ks[8], upd_in, (d_msg, d_h)),
        bu1=lin(ks[9], upd_in, (1, d_h)),
        wu2=lin(ks[10], d_h, (d_h, d_up)),
        bu2=lin(ks[11], d_h, (1, d_up)),
    )
    # TODO(synk): bn=True MLPs and the 'gin'/'local' branches (central_encoder,
    # eps) of the module are not exercised in this config.


if __name__ == "__main__":
    key = jax.random.PRNGKey(0)
    N, E = 16, 32
    d_in0, d_degree, d_id = 4, 1, 3
    d_msg, d_up, d_h = 8, 16, 32
    d_in = d_in0 + d_degree            # after cat([x, degrees])

    k1, k2, k3, kp = jax.random.split(key, 4)
    x = jax.random.normal(k1, (N, d_in0), jnp.float32)
    identifiers = jax.random.normal(k2, (N, d_id), jnp.float32)
    edge_index = jax.random.randint(k3, (2, E), 0, N, jnp.int32)
    degrees = jnp.zeros((N,), jnp.float32).at[edge_index[1]].add(1.0)

    params = init_params(kp, d_in, d_id, d_msg, d_up, d_h)

    fwd = jax.jit(gsn_sparse_forward)
    out = fwd(x, edge_index, identifiers, degrees, params)
    out = jax.block_until_ready(out)

    ref = gsn_sparse_reference(x, edge_index, identifiers, degrees, params)
    assert out.shape == (N, d_up)
    np.testing.assert_allclose(np.asarray(out), np.asarray(ref),
                               rtol=1e-5, atol=1e-5)
    print("KERNEL_OK")
</pallas_src>

<mosaic_0001>
module attributes {stable_mosaic.version = 11 : i64} {
  func.func @_agg_update_kernel(%arg0: i32, %arg1: i32, %arg2: memref<1x128xi32, #tpu.memory_space<vmem>>, %arg3: memref<128x128xf32, #tpu.memory_space<vmem>>, %arg4: memref<16x128xf32, #tpu.memory_space<vmem>>, %arg5: memref<128x128xf32, #tpu.memory_space<vmem>>, %arg6: memref<128x128xf32, #tpu.memory_space<vmem>>, %arg7: memref<1x128xf32, #tpu.memory_space<vmem>>, %arg8: memref<128x128xf32, #tpu.memory_space<vmem>>, %arg9: memref<1x128xf32, #tpu.memory_space<vmem>>, %arg10: memref<16x128xf32, #tpu.memory_space<vmem>>, %arg11: memref<16x128xf32, #tpu.memory_space<vmem>>) attributes {dimension_semantics = [#tpu.dimension_semantics<parallel>, #tpu.dimension_semantics<arbitrary>], iteration_bounds = array<i64: 1, 1>, scalar_prefetch = 0 : i64, scratch_operands = 1 : i64, tpu.core_type = #tpu.core_type<tc>, window_params = [{transform_indices = @transform_0, window_bounds = array<i64: 1, 128>}, {transform_indices = @transform_1, window_bounds = array<i64: 128, 128>}, {transform_indices = @transform_2, window_bounds = array<i64: 16, 128>}, {pipeline_mode = #tpu.pipeline_mode<synchronous>, transform_indices = @transform_3, window_bounds = array<i64: 128, 128>}, {pipeline_mode = #tpu.pipeline_mode<synchronous>, transform_indices = @transform_4, window_bounds = array<i64: 128, 128>}, {pipeline_mode = #tpu.pipeline_mode<synchronous>, transform_indices = @transform_5, window_bounds = array<i64: 1, 128>}, {pipeline_mode = #tpu.pipeline_mode<synchronous>, transform_indices = @transform_6, window_bounds = array<i64: 128, 128>}, {pipeline_mode = #tpu.pipeline_mode<synchronous>, transform_indices = @transform_7, window_bounds = array<i64: 1, 128>}, {transform_indices = @transform_8, window_bounds = array<i64: 16, 128>}]} {
    %c0_i32 = arith.constant 0 : i32
    %0 = arith.cmpi eq, %arg1, %c0_i32 : i32
    %1 = arith.extui %0 : i1 to i32
    %c0_i32_0 = arith.constant 0 : i32
    %2 = arith.cmpi ne, %1, %c0_i32_0 : i32
    scf.if %2 {
      %cst_10 = arith.constant 0.000000e+00 : f32
      %27 = vector.broadcast %cst_10 : f32 to vector<16x128xf32>
      %c0_11 = arith.constant 0 : index
      %c0_12 = arith.constant 0 : index
      %28 = vector.load %arg11[%c0_11, %c0_12] : memref<16x128xf32, #tpu.memory_space<vmem>>, vector<16x128xf32>
      tpu.vector_store %arg11[%c0_11, %c0_12], %27 {strides = array<i32>} : memref<16x128xf32, #tpu.memory_space<vmem>>, vector<16x128xf32>,
    } else {
    }
    %c16_i32 = arith.constant 16 : i32
    %3 = arith.muli %arg0, %c16_i32 : i32
    %4 = tpu.iota {dimensions = array<i32: 0>} : vector<16x128xi32>
    %5 = vector.broadcast %3 : i32 to vector<16x128xi32>
    %6 = arith.addi %5, %4 : vector<16x128xi32>
    %c0 = arith.constant 0 : index
    %c0_1 = arith.constant 0 : index
    %7 = vector.load %arg2[%c0, %c0_1] : memref<1x128xi32, #tpu.memory_space<vmem>>, vector<1x128xi32>
    %8 = vector.broadcast %7 : vector<1x128xi32> to vector<16x128xi32>
    %9 = arith.cmpi eq, %6, %8 : vector<16x128xi32>
    %c128_i32 = arith.constant 128 : i32
    %10 = arith.muli %arg1, %c128_i32 : i32
    %11 = tpu.iota {dimensions = array<i32: 1>} : vector<16x128xi32>
    %12 = vector.broadcast %10 : i32 to vector<16x128xi32>
    %13 = arith.addi %12, %11 : vector<16x128xi32>
    %c32_i32 = arith.constant 32 : i32
    %14 = vector.broadcast %c32_i32 : i32 to vector<16x128xi32>
    %15 = arith.cmpi slt, %13, %14 : vector<16x128xi32>
    %16 = arith.andi %9, %15 : vector<16x128xi1>
    %c0_2 = arith.constant 0 : index
    %c0_3 = arith.constant 0 : index
    %17 = vector.load %arg11[%c0_2, %c0_3] : memref<16x128xf32, #tpu.memory_space<vmem>>, vector<16x128xf32>
    %18 = arith.extui %16 : vector<16x128xi1> to vector<16x128xi32>
    %19 = arith.sitofp %18 : vector<16x128xi32> to vector<16x128xf32>
    %c0_4 = arith.constant 0 : index
    %c0_5 = arith.constant 0 : index
    %20 = vector.load %arg3[%c0_4, %c0_5] : memref<128x128xf32, #tpu.memory_space<vmem>>, vector<128x128xf32>
    %cst = arith.constant dense<0.000000e+00> : vector<16x128xf32>
    %21 = tpu.matmul %19, %20, %cst {dimension_numbers = #tpu.dot_dimension_numbers<[1], [0], [0], [1], [0, 0, 1, 1], [], []>} : vector<16x128xf32>, vector<128x128xf32>, vector<16x128xf32> -> vector<16x128xf32>
    %22 = arith.addf %17, %21 : vector<16x128xf32>
    %c0_6 = arith.constant 0 : index
    %c0_7 = arith.constant 0 : index
    %23 = vector.load %arg11[%c0_6, %c0_7] : memref<16x128xf32, #tpu.memory_space<vmem>>, vector<16x128xf32>
    tpu.vector_store %arg11[%c0_6, %c0_7], %22 {strides = array<i32>} : memref<16x128xf32, #tpu.memory_space<vmem>>, vector<16x128xf32>,
    %c0_i32_8 = arith.constant 0 : i32
    %24 = arith.cmpi eq, %arg1, %c0_i32_8 : i32
    %25 = arith.extui %24 : i1 to i32
    %c0_i32_9 = arith.constant 0 : i32
    %26 = arith.cmpi ne, %25, %c0_i32_9 : i32
    scf.if %26 {
      %c0_10 = arith.constant 0 : index
      %c0_11 = arith.constant 0 : index
      %27 = vector.load %arg4[%c0_10, %c0_11] : memref<16x128xf32, #tpu.memory_space<vmem>>, vector<16x128xf32>
      %c0_12 = arith.constant 0 : index
      %c0_13 = arith.constant 0 : index
      %28 = vector.load %arg5[%c0_12, %c0_13] : memref<128x128xf32, #tpu.memory_space<vmem>>, vector<128x128xf32>
      %cst_14 = arith.constant dense<0.000000e+00> : vector<16x128xf32>
      %29 = tpu.matmul %27, %28, %cst_14 {dimension_numbers = #tpu.dot_dimension_numbers<[1], [0], [0], [1], [0, 0, 1, 1], [], []>} : vector<16x128xf32>, vector<128x128xf32>, vector<16x128xf32> -> vector<16x128xf32>
      %c0_15 = arith.constant 0 : index
      %c0_16 = arith.constant 0 : index
      %30 = vector.load %arg11[%c0_15, %c0_16] : memref<16x128xf32, #tpu.memory_space<vmem>>, vector<16x128xf32>
      %c0_17 = arith.constant 0 : index
      %c0_18 = arith.constant 0 : index
      %31 = vector.load %arg6[%c0_17, %c0_18] : memref<128x128xf32, #tpu.memory_space<vmem>>, vector<128x128xf32>
      %cst_19 = arith.constant dense<0.000000e+00> : vector<16x128xf32>
      %32 = tpu.matmul %30, %31, %cst_19 {dimension_numbers = #tpu.dot_dimension_numbers<[1], [0], [0], [1], [0, 0, 1, 1], [], []>} : vector<16x128xf32>, vector<128x128xf32>, vector<16x128xf32> -> vector<16x128xf32>
      %33 = arith.addf %29, %32 : vector<16x128xf32>
      %c0_20 = arith.constant 0 : index
      %c0_21 = arith.constant 0 : index
      %34 = vector.load %arg7[%c0_20, %c0_21] : memref<1x128xf32, #tpu.memory_space<vmem>>, vector<1x128xf32>
      %35 = vector.broadcast %34 : vector<1x128xf32> to vector<16x128xf32>
      %36 = arith.addf %33, %35 : vector<16x128xf32>
      %cst_22 = arith.constant 0.000000e+00 : f32
      %37 = vector.broadcast %cst_22 : f32 to vector<16x128xf32>
      %38 = arith.maximumf %36, %37 : vector<16x128xf32>
      %c0_23 = arith.constant 0 : index
      %c0_24 = arith.constant 0 : index
      %39 = vector.load %arg8[%c0_23, %c0_24] : memref<128x128xf32, #tpu.memory_space<vmem>>, vector<128x128xf32>
      %cst_25 = arith.constant dense<0.000000e+00> : vector<16x128xf32>
      %40 = tpu.matmul %38, %39, %cst_25 {dimension_numbers = #tpu.dot_dimension_numbers<[1], [0], [0], [1], [0, 0, 1, 1], [], []>} : vector<16x128xf32>, vector<128x128xf32>, vector<16x128xf32> -> vector<16x128xf32>
      %c0_26 = arith.constant 0 : index
      %c0_27 = arith.constant 0 : index
      %41 = vector.load %arg9[%c0_26, %c0_27] : memref<1x128xf32, #tpu.memory_space<vmem>>, vector<1x128xf32>
      %42 = vector.broadcast %41 : vector<1x128xf32> to vector<16x128xf32>
      %43 = arith.addf %40, %42 : vector<16x128xf32>
      %c0_28 = arith.constant 0 : index
      %c0_29 = arith.constant 0 : index
      %44 = vector.load %arg10[%c0_28, %c0_29] : memref<16x128xf32, #tpu.memory_space<vmem>>, vector<16x128xf32>
      tpu.vector_store %arg10[%c0_28, %c0_29], %43 {strides = array<i32>} : memref<16x128xf32, #tpu.memory_space<vmem>>, vector<16x128xf32>,
    } else {
    }
    return
  }
  func.func @transform_0(%arg0: i32, %arg1: i32) -> (i32, i32) {
    %c0_i32 = arith.constant 0 : i32
    %c0_i32_0 = arith.constant 0 : i32
    return %c0_i32, %arg1 : i32, i32
  }
  func.func @transform_1(%arg0: i32, %arg1: i32) -> (i32, i32) {
    %c0_i32 = arith.constant 0 : i32
    %c0_i32_0 = arith.constant 0 : i32
    return %arg1, %c0_i32 : i32, i32
  }
  func.func @transform_2(%arg0: i32, %arg1: i32) -> (i32, i32) {
    %c0_i32 = arith.constant 0 : i32
    %c0_i32_0 = arith.constant 0 : i32
    return %arg0, %c0_i32 : i32, i32
  }
  func.func @transform_3(%arg0: i32, %arg1: i32) -> (i32, i32) {
    %c0_i32 = arith.constant 0 : i32
    %c0_i32_0 = arith.constant 0 : i32
    %c0_i32_1 = arith.constant 0 : i32
    return %c0_i32, %c0_i32_0 : i32, i32
  }
  func.func @transform_4(%arg0: i32, %arg1: i32) -> (i32, i32) {
    %c0_i32 = arith.constant 0 : i32
    %c0_i32_0 = arith.constant 0 : i32
    %c0_i32_1 = arith.constant 0 : i32
    return %c0_i32, %c0_i32_0 : i32, i32
  }
  func.func @transform_5(%arg0: i32, %arg1: i32) -> (i32, i32) {
    %c0_i32 = arith.constant 0 : i32
    %c0_i32_0 = arith.constant 0 : i32
    %c0_i32_1 = arith.constant 0 : i32
    return %c0_i32, %c0_i32_0 : i32, i32
  }
  func.func @transform_6(%arg0: i32, %arg1: i32) -> (i32, i32) {
    %c0_i32 = arith.constant 0 : i32
    %c0_i32_0 = arith.constant 0 : i32
    %c0_i32_1 = arith.constant 0 : i32
    return %c0_i32, %c0_i32_0 : i32, i32
  }
  func.func @transform_7(%arg0: i32, %arg1: i32) -> (i32, i32) {
    %c0_i32 = arith.constant 0 : i32
    %c0_i32_0 = arith.constant 0 : i32
    %c0_i32_1 = arith.constant 0 : i32
    return %c0_i32, %c0_i32_0 : i32, i32
  }
  func.func @transform_8(%arg0: i32, %arg1: i32) -> (i32, i32) {
    %c0_i32 = arith.constant 0 : i32
    %c0_i32_0 = arith.constant 0 : i32
    return %arg0, %c0_i32 : i32, i32
  }
}

module attributes {stable_mosaic.version = 11 : i64} {
  func.func @_msg_kernel(%arg0: i32, %arg1: memref<128xi32, #tpu.memory_space<smem>>, %arg2: memref<128xi32, #tpu.memory_space<smem>>, %arg3: memref<16x128xf32, #tpu.memory_space<vmem>>, %arg4: memref<128x128xf32, #tpu.memory_space<vmem>>, %arg5: memref<128x128xf32, #tpu.memory_space<vmem>>, %arg6: memref<1x128xf32, #tpu.memory_space<vmem>>, %arg7: memref<128x128xf32, #tpu.memory_space<vmem>>, %arg8: memref<1x128xf32, #tpu.memory_space<vmem>>, %arg9: memref<128x128xf32, #tpu.memory_space<vmem>>, %arg10: memref<128x128xf32, #tpu.memory_space<vmem>>, %arg11: memref<128x128xf32, #tpu.memory_space<vmem>>) attributes {dimension_semantics = [#tpu.dimension_semantics<parallel>], iteration_bounds = array<i64: 1>, scalar_prefetch = 2 : i64, scratch_operands = 2 : i64, tpu.core_type = #tpu.core_type<tc>, window_params = [{pipeline_mode = #tpu.pipeline_mode<synchronous>, transform_indices = @transform_0, window_bounds = array<i64: 16, 128>}, {pipeline_mode = #tpu.pipeline_mode<synchronous>, transform_indices = @transform_1, window_bounds = array<i64: 128, 128>}, {pipeline_mode = #tpu.pipeline_mode<synchronous>, transform_indices = @transform_2, window_bounds = array<i64: 128, 128>}, {pipeline_mode = #tpu.pipeline_mode<synchronous>, transform_indices = @transform_3, window_bounds = array<i64: 1, 128>}, {pipeline_mode = #tpu.pipeline_mode<synchronous>, transform_indices = @transform_4, window_bounds = array<i64: 128, 128>}, {pipeline_mode = #tpu.pipeline_mode<synchronous>, transform_indices = @transform_5, window_bounds = array<i64: 1, 128>}, {transform_indices = @transform_6, window_bounds = array<i64: 128, 128>}]} {
    %c128_i32 = arith.constant 128 : i32
    %0 = arith.muli %arg0, %c128_i32 : i32
    %c0_i32 = arith.constant 0 : i32
    %c128_i32_0 = arith.constant 128 : i32
    %1 = arith.addi %c0_i32, %c128_i32_0 : i32
    %c1_i32 = arith.constant 1 : i32
    scf.for %arg12 = %c0_i32 to %1 step %c1_i32  : i32 {
      %20 = arith.addi %0, %arg12 : i32
      %21 = arith.index_cast %20 : i32 to index
      %22 = memref.load %arg2[%21] : memref<128xi32, #tpu.memory_space<smem>>
      %23 = arith.addi %0, %arg12 : i32
      %24 = arith.index_cast %23 : i32 to index
      %25 = memref.load %arg1[%24] : memref<128xi32, #tpu.memory_space<smem>>
      %26 = arith.index_cast %22 : i32 to index
      %c0_20 = arith.constant 0 : index
      %27 = vector.load %arg3[%26, %c0_20] : memref<16x128xf32, #tpu.memory_space<vmem>>, vector<1x128xf32>
      %28 = arith.index_cast %arg12 : i32 to index
      %c0_21 = arith.constant 0 : index
      %29 = vector.load %arg10[%28, %c0_21] : memref<128x128xf32, #tpu.memory_space<vmem>>, vector<1x128xf32>
      tpu.vector_store %arg10[%28, %c0_21], %27 {strides = array<i32>} : memref<128x128xf32, #tpu.memory_space<vmem>>, vector<1x128xf32>,
      %30 = arith.index_cast %25 : i32 to index
      %c0_22 = arith.constant 0 : index
      %31 = vector.load %arg3[%30, %c0_22] : memref<16x128xf32, #tpu.memory_space<vmem>>, vector<1x128xf32>
      %32 = arith.index_cast %arg12 : i32 to index
      %c0_23 = arith.constant 0 : index
      %33 = vector.load %arg11[%32, %c0_23] : memref<128x128xf32, #tpu.memory_space<vmem>>, vector<1x128xf32>
      tpu.vector_store %arg11[%32, %c0_23], %31 {strides = array<i32>} : memref<128x128xf32, #tpu.memory_space<vmem>>, vector<1x128xf32>,
    }
    %c128_i32_1 = arith.constant 128 : i32
    %c0 = arith.constant 0 : index
    %c0_2 = arith.constant 0 : index
    %2 = vector.load %arg10[%c0, %c0_2] : memref<128x128xf32, #tpu.memory_space<vmem>>, vector<128x128xf32>
    %c0_3 = arith.constant 0 : index
    %c0_4 = arith.constant 0 : index
    %3 = vector.load %arg4[%c0_3, %c0_4] : memref<128x128xf32, #tpu.memory_space<vmem>>, vector<128x128xf32>
    %cst = arith.constant dense<0.000000e+00> : vector<128x128xf32>
    %4 = tpu.matmul %2, %3, %cst {dimension_numbers = #tpu.dot_dimension_numbers<[1], [0], [0], [1], [0, 0, 1, 1], [], []>} : vector<128x128xf32>, vector<128x128xf32>, vector<128x128xf32> -> vector<128x128xf32>
    %c0_5 = arith.constant 0 : index
    %c0_6 = arith.constant 0 : index
    %5 = vector.load %arg11[%c0_5, %c0_6] : memref<128x128xf32, #tpu.memory_space<vmem>>, vector<128x128xf32>
    %c0_7 = arith.constant 0 : index
    %c0_8 = arith.constant 0 : index
    %6 = vector.load %arg5[%c0_7, %c0_8] : memref<128x128xf32, #tpu.memory_space<vmem>>, vector<128x128xf32>
    %cst_9 = arith.constant dense<0.000000e+00> : vector<128x128xf32>
    %7 = tpu.matmul %5, %6, %cst_9 {dimension_numbers = #tpu.dot_dimension_numbers<[1], [0], [0], [1], [0, 0, 1, 1], [], []>} : vector<128x128xf32>, vector<128x128xf32>, vector<128x128xf32> -> vector<128x128xf32>
    %8 = arith.addf %4, %7 : vector<128x128xf32>
    %c0_10 = arith.constant 0 : index
    %c0_11 = arith.constant 0 : index
    %9 = vector.load %arg6[%c0_10, %c0_11] : memref<1x128xf32, #tpu.memory_space<vmem>>, vector<1x128xf32>
    %10 = vector.broadcast %9 : vector<1x128xf32> to vector<128x128xf32>
    %11 = arith.addf %8, %10 : vector<128x128xf32>
    %cst_12 = arith.constant 0.000000e+00 : f32
    %12 = vector.broadcast %cst_12 : f32 to vector<128x128xf32>
    %13 = arith.maximumf %11, %12 : vector<128x128xf32>
    %c0_13 = arith.constant 0 : index
    %c0_14 = arith.constant 0 : index
    %14 = vector.load %arg7[%c0_13, %c0_14] : memref<128x128xf32, #tpu.memory_space<vmem>>, vector<128x128xf32>
    %cst_15 = arith.constant dense<0.000000e+00> : vector<128x128xf32>
    %15 = tpu.matmul %13, %14, %cst_15 {dimension_numbers = #tpu.dot_dimension_numbers<[1], [0], [0], [1], [0, 0, 1, 1], [], []>} : vector<128x128xf32>, vector<128x128xf32>, vector<128x128xf32> -> vector<128x128xf32>
    %c0_16 = arith.constant 0 : index
    %c0_17 = arith.constant 0 : index
    %16 = vector.load %arg8[%c0_16, %c0_17] : memref<1x128xf32, #tpu.memory_space<vmem>>, vector<1x128xf32>
    %17 = vector.broadcast %16 : vector<1x128xf32> to vector<128x128xf32>
    %18 = arith.addf %15, %17 : vector<128x128xf32>
    %c0_18 = arith.constant 0 : index
    %c0_19 = arith.constant 0 : index
    %19 = vector.load %arg9[%c0_18, %c0_19] : memref<128x128xf32, #tpu.memory_space<vmem>>, vector<128x128xf32>
    tpu.vector_store %arg9[%c0_18, %c0_19], %18 {strides = array<i32>} : memref<128x128xf32, #tpu.memory_space<vmem>>, vector<128x128xf32>,
    return
  }
  func.func @transform_0(%arg0: i32, %arg1: memref<128xi32, #tpu.memory_space<smem>>, %arg2: memref<128xi32, #tpu.memory_space<smem>>) -> (i32, i32) {
    %c0_i32 = arith.constant 0 : i32
    %c0_i32_0 = arith.constant 0 : i32
    %c0_i32_1 = arith.constant 0 : i32
    return %c0_i32, %c0_i32_0 : i32, i32
  }
  func.func @transform_1(%arg0: i32, %arg1: memref<128xi32, #tpu.memory_space<smem>>, %arg2: memref<128xi32, #tpu.memory_space<smem>>) -> (i32, i32) {
    %c0_i32 = arith.constant 0 : i32
    %c0_i32_0 = arith.constant 0 : i32
    %c0_i32_1 = arith.constant 0 : i32
    return %c0_i32, %c0_i32_0 : i32, i32
  }
  func.func @transform_2(%arg0: i32, %arg1: memref<128xi32, #tpu.memory_space<smem>>, %arg2: memref<128xi32, #tpu.memory_space<smem>>) -> (i32, i32) {
    %c0_i32 = arith.constant 0 : i32
    %c0_i32_0 = arith.constant 0 : i32
    %c0_i32_1 = arith.constant 0 : i32
    return %c0_i32, %c0_i32_0 : i32, i32
  }
  func.func @transform_3(%arg0: i32, %arg1: memref<128xi32, #tpu.memory_space<smem>>, %arg2: memref<128xi32, #tpu.memory_space<smem>>) -> (i32, i32) {
    %c0_i32 = arith.constant 0 : i32
    %c0_i32_0 = arith.constant 0 : i32
    %c0_i32_1 = arith.constant 0 : i32
    return %c0_i32, %c0_i32_0 : i32, i32
  }
  func.func @transform_4(%arg0: i32, %arg1: memref<128xi32, #tpu.memory_space<smem>>, %arg2: memref<128xi32, #tpu.memory_space<smem>>) -> (i32, i32) {
    %c0_i32 = arith.constant 0 : i32
    %c0_i32_0 = arith.constant 0 : i32
    %c0_i32_1 = arith.constant 0 : i32
    return %c0_i32, %c0_i32_0 : i32, i32
  }
  func.func @transform_5(%arg0: i32, %arg1: memref<128xi32, #tpu.memory_space<smem>>, %arg2: memref<128xi32, #tpu.memory_space<smem>>) -> (i32, i32) {
    %c0_i32 = arith.constant 0 : i32
    %c0_i32_0 = arith.constant 0 : i32
    %c0_i32_1 = arith.constant 0 : i32
    return %c0_i32, %c0_i32_0 : i32, i32
  }
  func.func @transform_6(%arg0: i32, %arg1: memref<128xi32, #tpu.memory_space<smem>>, %arg2: memref<128xi32, #tpu.memory_space<smem>>) -> (i32, i32) {
    %c0_i32 = arith.constant 0 : i32
    %c0_i32_0 = arith.constant 0 : i32
    return %arg0, %c0_i32 : i32, i32
  }
}

</mosaic_0001>

<llo_original>
// kernel: gsn_sparse_forward.3
$region0: #{gsn_sparse_forward.3}
  #allocation0 [shape = 'u32[]', space=smem, size = 0x4, offset = 0x4, fixed_abs, tag = 'smem constant byte address 0x4 - core index']
  #allocation1 [shape = 'u32[144,128]{1,0:T(1,128)}', space=vmem, size = 0x12000, scoped, tag = 'internal scratch']
  #allocation2 [shape = 'f32[16,128]{1,0:T(8,128)}', space=vmem, size = 0x2000, scoped, tag = 'scratch operand']
  %s0 = inlined_call_operand.vmem [shape: s32[1,128], index: 0, kind: input, shape index: {}]
  %s1 = inlined_call_operand.vmem [shape: f32[128,128], index: 1, kind: input, shape index: {}]
  %s2 = inlined_call_operand.vmem [shape: f32[16,128], index: 2, kind: input, shape index: {}]
  %s3 = inlined_call_operand.vmem [shape: f32[128,128], index: 3, kind: input, shape index: {}]
  %s4 = inlined_call_operand.vmem [shape: f32[128,128], index: 4, kind: input, shape index: {}]
  %s5 = inlined_call_operand.vmem [shape: f32[1,128], index: 5, kind: input, shape index: {}]
  %s6 = inlined_call_operand.vmem [shape: f32[128,128], index: 6, kind: input, shape index: {}]
  %s7 = inlined_call_operand.vmem [shape: f32[1,128], index: 7, kind: input, shape index: {}]
  %s8 = inlined_call_operand.hbm [shape: f32[16,128], index: 8, kind: output, shape index: {}]
  %s9 = sld [smem:[#allocation0]]
  $region50: #{gsn_sparse_forward.3} parent=0
    _
  %s11 = ssub.s32 1, %s9
  %s12 = scalar_select 0, %s11, %s9
  $region1: #{gsn_sparse_forward.3} parent=0
    #allocation3 [shape = 'u8[8192]{0}', space=vmem, size = 0x2000, scoped, tag = 'output window, operand 0, single buffered']
    #allocation4 [shape = 's32[1]{0}', space=sflag, size = 0x4, scoped, tag = 'scoped memory for gsn_sparse_forward.3']
    %13 = vsyncpa [#allocation4], 0
    // Predicated region
    $region2: #{gsn_sparse_forward.3} parent=1 // pred_check
      _
    $region3: #{gsn_sparse_forward.3} parent=1 // pred_check_branch
      %15 = sbr.rel (0) target = $region5
    $region4: #{gsn_sparse_forward.3} parent=1 // pred_region
      _
    $region5: #{gsn_sparse_forward.3} parent=1 // pred_fallthru
      _
    // Predicated region
    $region6: #{gsn_sparse_forward.3} parent=1 // pred_check
      _
    $region7: #{gsn_sparse_forward.3} parent=1 // pred_check_branch
      %17 = sbr.rel (0) target = $region9
    $region8: #{gsn_sparse_forward.3} parent=1 // pred_region
      _
    $region9: #{gsn_sparse_forward.3} parent=1 // pred_fallthru
      _
    // Predicated region
    $region10: #{gsn_sparse_forward.3} parent=1 // pred_check
      _
    $region11: #{gsn_sparse_forward.3} parent=1 // pred_check_branch
      %19 = sbr.rel (0) target = $region13
    $region12: #{gsn_sparse_forward.3} parent=1 // pred_region
      _
    $region13: #{gsn_sparse_forward.3} parent=1 // pred_fallthru
      _
    // Predicated region
    $region14: #{gsn_sparse_forward.3} parent=1 // pred_check
      _
    $region15: #{gsn_sparse_forward.3} parent=1 // pred_check_branch
      %21 = sbr.rel (0) target = $region17
    $region16: #{gsn_sparse_forward.3} parent=1 // pred_region
      _
    $region17: #{gsn_sparse_forward.3} parent=1 // pred_fallthru
      _
    // Predicated region
    $region18: #{gsn_sparse_forward.3} parent=1 // pred_check
      _
    $region19: #{gsn_sparse_forward.3} parent=1 // pred_check_branch
      %23 = sbr.rel (0) target = $region21
    $region20: #{gsn_sparse_forward.3} parent=1 // pred_region
      _
    $region21: #{gsn_sparse_forward.3} parent=1 // pred_fallthru
      _
    // Predicated region
    $region22: #{gsn_sparse_forward.3} parent=1 // pred_check
      _
    $region23: #{gsn_sparse_forward.3} parent=1 // pred_check_branch
      %25 = sbr.rel (0) target = $region25
    $region24: #{gsn_sparse_forward.3} parent=1 // pred_region
      _
    $region25: #{gsn_sparse_forward.3} parent=1 // pred_fallthru
      _
    // Predicated region
    $region26: #{gsn_sparse_forward.3} parent=1 // pred_check
      _
    $region27: #{gsn_sparse_forward.3} parent=1 // pred_check_branch
      %27 = sbr.rel (0) target = $region29
    $region28: #{gsn_sparse_forward.3} parent=1 // pred_region
      _
    $region29: #{gsn_sparse_forward.3} parent=1 // pred_fallthru
      _
    // Predicated region
    $region30: #{gsn_sparse_forward.3} parent=1 // pred_check
      _
    $region31: #{gsn_sparse_forward.3} parent=1 // pred_check_branch
      %29 = sbr.rel (0) target = $region33
    $region32: #{gsn_sparse_forward.3} parent=1 // pred_region
      _
    $region33: #{gsn_sparse_forward.3} parent=1 // pred_fallthru
      _
    %p30 = scmp.eq.s32.totalorder 0, 0
    // Predicated region
    $region34: #{gsn_sparse_forward.3} parent=1 // pred_check
      %p31 = pneg %p30
    $region35: #{gsn_sparse_forward.3} parent=1 // pred_check_branch
      %33 = sbr.rel (%p31) target = $region37
    $region36: #{gsn_sparse_forward.3} parent=1 // pred_region
      %34 = vst [vmem:[#allocation2] sm:$0xff] 0.0
      %35 = vst [vmem:[#allocation2 + $0x8] sm:$0xff] 0.0
    $region37: #{gsn_sparse_forward.3} parent=1 // pred_fallthru
      _
    %s36 = smul.u32 0, 16
    %v37 = vlaneseq
    %v38 = vshrl.u32 %v37, 7
    %v39 = vadd.s32 %v38, 8
    %v40 = vstv %s36
    %v41 = vadd.s32 %v40, %v38
    %v42 = vadd.s32 %v40, %v39
    %v43 = vld [vmem:[%s0] sm:$0x1]
    %v44 = vlaneseq
    %v45 = vshrl.u32 %v44, 7
    %v46 = vsub.s32 0, %v45
    %v47 = vrot.slane %v43, %v46
    %vm48 = vcmp.eq.s32.totalorder %v41, %v47
    %vm49 = vcmp.eq.s32.totalorder %v42, %v47
    %s50 = smul.u32 0, 128
    %v51 = vlaneseq
    %v52 = vand.u32 %v51, 127
    %v53 = vstv %s50
    %v54 = vadd.s32 %v53, %v52
    %vm55 = vcmp.lt.s32.totalorder %v54, 32
    %vm56 = vmand %vm48, %vm55
    %vm57 = vmand %vm49, %vm55
    %v58 = vld [vmem:[#allocation2] sm:$0xff]
    %v59 = vld [vmem:[#allocation2 + $0x8] sm:$0xff]
    %v60 = vsel %vm56, 1, 0
    %v61 = vsel %vm57, 1, 0
    %v62 = vcvt.s32.f32 %v60
    %v63 = vcvt.s32.f32 %v61
    %v64 = vld [vmem:[%s1] sm:$0xff]
    %v65 = vld [vmem:[%s1 + $0x8] sm:$0xff]
    %v66 = vld [vmem:[%s1 + $0x10] sm:$0xff]
    %v67 = vld [vmem:[%s1 + $0x18] sm:$0xff]
    %v68 = vld [vmem:[%s1 + $0x20] sm:$0xff]
    %v69 = vld [vmem:[%s1 + $0x28] sm:$0xff]
    %v70 = vld [vmem:[%s1 + $0x30] sm:$0xff]
    %v71 = vld [vmem:[%s1 + $0x38] sm:$0xff]
    %v72 = vld [vmem:[%s1 + $0x40] sm:$0xff]
    %v73 = vld [vmem:[%s1 + $0x48] sm:$0xff]
    %v74 = vld [vmem:[%s1 + $0x50] sm:$0xff]
    %v75 = vld [vmem:[%s1 + $0x58] sm:$0xff]
    %v76 = vld [vmem:[%s1 + $0x60] sm:$0xff]
    %v77 = vld [vmem:[%s1 + $0x68] sm:$0xff]
    %v78 = vld [vmem:[%s1 + $0x70] sm:$0xff]
    %v79 = vld [vmem:[%s1 + $0x78] sm:$0xff]
    %80 = vmatprep.subr.mxu0 0.0
    %81 = vmatpush1.msra.mxu0 %v79
    %82 = vmatprep.subr.mxu0 0.0
    %83 = vmatpush1.msra.mxu0 %v78
    %84 = vmatprep.subr.mxu0 0.0
    %85 = vmatpush1.msra.mxu0 %v77
    %86 = vmatprep.subr.mxu0 0.0
    %87 = vmatpush1.msra.mxu0 %v76
    %88 = vmatprep.subr.mxu0 0.0
    %89 = vmatpush1.msra.mxu0 %v75
    %90 = vmatprep.subr.mxu0 0.0
    %91 = vmatpush1.msra.mxu0 %v74
    %92 = vmatprep.subr.mxu0 0.0
    %93 = vmatpush1.msra.mxu0 %v73
    %94 = vmatprep.subr.mxu0 0.0
    %95 = vmatpush1.msra.mxu0 %v72
    %96 = vmatprep.subr.mxu0 0.0
    %97 = vmatpush1.msra.mxu0 %v71
    %98 = vmatprep.subr.mxu0 0.0
    %99 = vmatpush1.msra.mxu0 %v70
    %100 = vmatprep.subr.mxu0 0.0
    %101 = vmatpush1.msra.mxu0 %v69
    %102 = vmatprep.subr.mxu0 0.0
    %103 = vmatpush1.msra.mxu0 %v68
    %104 = vmatprep.subr.mxu0 0.0
    %105 = vmatpush1.msra.mxu0 %v67
    %106 = vmatprep.subr.mxu0 0.0
    %107 = vmatpush1.msra.mxu0 %v66
    %108 = vmatprep.subr.mxu0 0.0
    %109 = vmatpush1.msra.mxu0 %v65
    %110 = vmatprep.subr.mxu0 0.0
    %111 = vmatpush1.msra.mxu0 %v64
    %112 = vmatprep.subr.mxu0 0.0
    %113 = vmatpush2.msra.mxu0 0.0
    %114 = vmatprep.subr.mxu0 0.0
    %115 = vmatpush2.msra.mxu0 0.0
    %116 = vmatprep.subr.mxu0 0.0
    %117 = vmatpush2.msra.mxu0 0.0
    %118 = vmatprep.subr.mxu0 0.0
    %119 = vmatpush2.msra.mxu0 0.0
    %120 = vmatprep.subr.mxu0 0.0
    %121 = vmatpush2.msra.mxu0 0.0
    %122 = vmatprep.subr.mxu0 0.0
    %123 = vmatpush2.msra.mxu0 0.0
    %124 = vmatprep.subr.mxu0 0.0
    %125 = vmatpush2.msra.mxu0 0.0
    %126 = vmatprep.subr.mxu0 0.0
    %127 = vmatpush2.msra.mxu0 0.0
    %128 = vmatprep.subr.mxu0 0.0
    %129 = vmatpush2.msra.mxu0 0.0
    %130 = vmatprep.subr.mxu0 0.0
    %131 = vmatpush2.msra.mxu0 0.0
    %132 = vmatprep.subr.mxu0 0.0
    %133 = vmatpush2.msra.mxu0 0.0
    %134 = vmatprep.subr.mxu0 0.0
    %135 = vmatpush2.msra.mxu0 0.0
    %136 = vmatprep.subr.mxu0 0.0
    %137 = vmatpush2.msra.mxu0 0.0
    %138 = vmatprep.subr.mxu0 0.0
    %139 = vmatpush2.msra.mxu0 0.0
    %140 = vmatprep.subr.mxu0 0.0
    %141 = vmatpush2.msra.mxu0 0.0
    %142 = vmatprep.subr.mxu0 0.0
    %143 = vmatpush2.msra.mxu0 0.0
    %144 = vmatprep.mubr.f32.mxu0 0.0
    %145 = vmatmul.mubr.f32.gmra.mxu0 %v62
    %v146 = vpop.f32.mrf.mxu0
    %v147 = vadd.f32 0.0, %v146
    %v148 = vpop.f32.mrf.mxu0
    %149 = vmatprep.mubr.f32.mxu0 0.0
    %150 = vmatmul.mubr.f32.gmra.mxu0 %v63
    %v151 = vpop.f32.mrf.mxu0
    %v152 = vadd.f32 0.0, %v151
    %v153 = vpop.f32.mrf.mxu0
    %154 = vdwg.mxu0
    %v155 = vadd.f32 %v58, %v147
    %v156 = vadd.f32 %v59, %v152
    %157 = vst [vmem:[#allocation2] sm:$0xff] %v155
    %158 = vst [vmem:[#allocation2 + $0x8] sm:$0xff] %v156
    // Predicated region
    $region38: #{gsn_sparse_forward.3} parent=1 // pred_check
      %p159 = pneg %p30
    $region39: #{gsn_sparse_forward.3} parent=1 // pred_check_branch
      %161 = sbr.rel (%p159) target = $region41
    $region40: #{gsn_sparse_forward.3} parent=1 // pred_region
      %v162 = vld [vmem:[%s2] sm:$0xff]
      %v163 = vld [vmem:[%s2 + $0x8] sm:$0xff]
      %v164 = vld [vmem:[%s3] sm:$0xff]
      %v165 = vld [vmem:[%s3 + $0x8] sm:$0xff]
      %v166 = vld [vmem:[%s3 + $0x10] sm:$0xff]
      %v167 = vld [vmem:[%s3 + $0x18] sm:$0xff]
      %v168 = vld [vmem:[%s3 + $0x20] sm:$0xff]
      %v169 = vld [vmem:[%s3 + $0x28] sm:$0xff]
      %v170 = vld [vmem:[%s3 + $0x30] sm:$0xff]
      %v171 = vld [vmem:[%s3 + $0x38] sm:$0xff]
      %v172 = vld [vmem:[%s3 + $0x40] sm:$0xff]
      %v173 = vld [vmem:[%s3 + $0x48] sm:$0xff]
      %v174 = vld [vmem:[%s3 + $0x50] sm:$0xff]
      %v175 = vld [vmem:[%s3 + $0x58] sm:$0xff]
      %v176 = vld [vmem:[%s3 + $0x60] sm:$0xff]
      %v177 = vld [vmem:[%s3 + $0x68] sm:$0xff]
      %v178 = vld [vmem:[%s3 + $0x70] sm:$0xff]
      %v179 = vld [vmem:[%s3 + $0x78] sm:$0xff]
      %v180 = vld [vmem:[#allocation2] sm:$0xff]
      %v181 = vld [vmem:[#allocation2 + $0x8] sm:$0xff]
      %v182 = vld [vmem:[%s4] sm:$0xff]
      %v183 = vld [vmem:[%s4 + $0x8] sm:$0xff]
      %v184 = vld [vmem:[%s4 + $0x10] sm:$0xff]
      %v185 = vld [vmem:[%s4 + $0x18] sm:$0xff]
      %v186 = vld [vmem:[%s4 + $0x20] sm:$0xff]
      %v187 = vld [vmem:[%s4 + $0x28] sm:$0xff]
      %v188 = vld [vmem:[%s4 + $0x30] sm:$0xff]
      %v189 = vld [vmem:[%s4 + $0x38] sm:$0xff]
      %v190 = vld [vmem:[%s4 + $0x40] sm:$0xff]
      %v191 = vld [vmem:[%s4 + $0x48] sm:$0xff]
      %v192 = vld [vmem:[%s4 + $0x50] sm:$0xff]
      %v193 = vld [vmem:[%s4 + $0x58] sm:$0xff]
      %v194 = vld [vmem:[%s4 + $0x60] sm:$0xff]
      %v195 = vld [vmem:[%s4 + $0x68] sm:$0xff]
      %v196 = vld [vmem:[%s4 + $0x70] sm:$0xff]
      %v197 = vld [vmem:[%s4 + $0x78] sm:$0xff]
      %198 = vmatprep.subr.mxu0 0.0
      %199 = vmatpush1.msra.mxu0 %v197
      %200 = vmatprep.subr.mxu0 0.0
      %201 = vmatpush1.msra.mxu0 %v196
      %202 = vmatprep.subr.mxu0 0.0
      %203 = vmatpush1.msra.mxu0 %v195
      %204 = vmatprep.subr.mxu0 0.0
      %205 = vmatpush1.msra.mxu0 %v194
      %206 = vmatprep.subr.mxu0 0.0
      %207 = vmatpush1.msra.mxu0 %v193
      %208 = vmatprep.subr.mxu0 0.0
      %209 = vmatpush1.msra.mxu0 %v192
      %210 = vmatprep.subr.mxu0 0.0
      %211 = vmatpush1.msra.mxu0 %v191
      %212 = vmatprep.subr.mxu0 0.0
      %213 = vmatpush1.msra.mxu0 %v190
      %214 = vmatprep.subr.mxu0 0.0
      %215 = vmatpush1.msra.mxu0 %v189
      %216 = vmatprep.subr.mxu0 0.0
      %217 = vmatpush1.msra.mxu0 %v188
      %218 = vmatprep.subr.mxu0 0.0
      %219 = vmatpush1.msra.mxu0 %v187
      %220 = vmatprep.subr.mxu0 0.0
      %221 = vmatpush1.msra.mxu0 %v186
      %222 = vmatprep.subr.mxu0 0.0
      %223 = vmatpush1.msra.mxu0 %v185
      %224 = vmatprep.subr.mxu0 0.0
      %225 = vmatpush1.msra.mxu0 %v184
      %226 = vmatprep.subr.mxu0 0.0
      %227 = vmatpush1.msra.mxu0 %v183
      %228 = vmatprep.subr.mxu0 0.0
      %229 = vmatpush1.msra.mxu0 %v182
      %230 = vmatprep.subr.mxu0 0.0
      %231 = vmatpush2.msra.mxu0 0.0
      %232 = vmatprep.subr.mxu0 0.0
      %233 = vmatpush2.msra.mxu0 0.0
      %234 = vmatprep.subr.mxu0 0.0
      %235 = vmatpush2.msra.mxu0 0.0
      %236 = vmatprep.subr.mxu0 0.0
      %237 = vmatpush2.msra.mxu0 0.0
      %238 = vmatprep.subr.mxu0 0.0
      %239 = vmatpush2.msra.mxu0 0.0
      %240 = vmatprep.subr.mxu0 0.0
      %241 = vmatpush2.msra.mxu0 0.0
      %242 = vmatprep.subr.mxu0 0.0
      %243 = vmatpush2.msra.mxu0 0.0
      %244 = vmatprep.subr.mxu0 0.0
      %245 = vmatpush2.msra.mxu0 0.0
      %246 = vmatprep.subr.mxu0 0.0
      %247 = vmatpush2.msra.mxu0 0.0
      %248 = vmatprep.subr.mxu0 0.0
      %249 = vmatpush2.msra.mxu0 0.0
      %250 = vmatprep.subr.mxu0 0.0
      %251 = vmatpush2.msra.mxu0 0.0
      %252 = vmatprep.subr.mxu0 0.0
      %253 = vmatpush2.msra.mxu0 0.0
      %254 = vmatprep.subr.mxu0 0.0
      %255 = vmatpush2.msra.mxu0 0.0
      %256 = vmatprep.subr.mxu0 0.0
      %257 = vmatpush2.msra.mxu0 0.0
      %258 = vmatprep.subr.mxu0 0.0
      %259 = vmatpush2.msra.mxu0 0.0
      %260 = vmatprep.subr.mxu0 0.0
      %261 = vmatpush2.msra.mxu0 0.0
      %262 = vmatprep.mubr.f32.mxu0 0.0
      %263 = vmatmul.mubr.f32.gmra.mxu0 %v180
      %v264 = vpop.f32.mrf.mxu0
      %v265 = vadd.f32 0.0, %v264
      %v266 = vpop.f32.mrf.mxu0
      %267 = vmatprep.mubr.f32.mxu0 0.0
      %268 = vmatmul.mubr.f32.gmra.mxu0 %v181
      %v269 = vpop.f32.mrf.mxu0
      %v270 = vadd.f32 0.0, %v269
      %v271 = vpop.f32.mrf.mxu0
      %272 = vdwg.mxu0
      %273 = vmatprep.subr.mxu0 0.0
      %274 = vmatpush1.msra.mxu0 %v179
      %275 = vmatprep.subr.mxu0 0.0
      %276 = vmatpush1.msra.mxu0 %v178
      %277 = vmatprep.subr.mxu0 0.0
      %278 = vmatpush1.msra.mxu0 %v177
      %279 = vmatprep.subr.mxu0 0.0
      %280 = vmatpush1.msra.mxu0 %v176
      %281 = vmatprep.subr.mxu0 0.0
      %282 = vmatpush1.msra.mxu0 %v175
      %283 = vmatprep.subr.mxu0 0.0
      %284 = vmatpush1.msra.mxu0 %v174
      %285 = vmatprep.subr.mxu0 0.0
      %286 = vmatpush1.msra.mxu0 %v173
      %287 = vmatprep.subr.mxu0 0.0
      %288 = vmatpush1.msra.mxu0 %v172
      %289 = vmatprep.subr.mxu0 0.0
      %290 = vmatpush1.msra.mxu0 %v171
      %291 = vmatprep.subr.mxu0 0.0
      %292 = vmatpush1.msra.mxu0 %v170
      %293 = vmatprep.subr.mxu0 0.0
      %294 = vmatpush1.msra.mxu0 %v169
      %295 = vmatprep.subr.mxu0 0.0
      %296 = vmatpush1.msra.mxu0 %v168
      %297 = vmatprep.subr.mxu0 0.0
      %298 = vmatpush1.msra.mxu0 %v167
      %299 = vmatprep.subr.mxu0 0.0
      %300 = vmatpush1.msra.mxu0 %v166
      %301 = vmatprep.subr.mxu0 0.0
      %302 = vmatpush1.msra.mxu0 %v165
      %303 = vmatprep.subr.mxu0 0.0
      %304 = vmatpush1.msra.mxu0 %v164
      %305 = vmatprep.subr.mxu0 0.0
      %306 = vmatpush2.msra.mxu0 0.0
      %307 = vmatprep.subr.mxu0 0.0
      %308 = vmatpush2.msra.mxu0 0.0
      %309 = vmatprep.subr.mxu0 0.0
      %310 = vmatpush2.msra.mxu0 0.0
      %311 = vmatprep.subr.mxu0 0.0
      %312 = vmatpush2.msra.mxu0 0.0
      %313 = vmatprep.subr.mxu0 0.0
      %314 = vmatpush2.msra.mxu0 0.0
      %315 = vmatprep.subr.mxu0 0.0
      %316 = vmatpush2.msra.mxu0 0.0
      %317 = vmatprep.subr.mxu0 0.0
      %318 = vmatpush2.msra.mxu0 0.0
      %319 = vmatprep.subr.mxu0 0.0
      %320 = vmatpush2.msra.mxu0 0.0
      %321 = vmatprep.subr.mxu0 0.0
      %322 = vmatpush2.msra.mxu0 0.0
      %323 = vmatprep.subr.mxu0 0.0
      %324 = vmatpush2.msra.mxu0 0.0
      %325 = vmatprep.subr.mxu0 0.0
      %326 = vmatpush2.msra.mxu0 0.0
      %327 = vmatprep.subr.mxu0 0.0
      %328 = vmatpush2.msra.mxu0 0.0
      %329 = vmatprep.subr.mxu0 0.0
      %330 = vmatpush2.msra.mxu0 0.0
      %331 = vmatprep.subr.mxu0 0.0
      %332 = vmatpush2.msra.mxu0 0.0
      %333 = vmatprep.subr.mxu0 0.0
      %334 = vmatpush2.msra.mxu0 0.0
      %335 = vmatprep.subr.mxu0 0.0
      %336 = vmatpush2.msra.mxu0 0.0
      %337 = vmatprep.mubr.f32.mxu0 0.0
      %338 = vmatmul.mubr.f32.gmra.mxu0 %v162
      %v339 = vpop.f32.mrf.mxu0
      %v340 = vadd.f32 %v265, %v339
      %v341 = vpop.f32.mrf.mxu0
      %342 = vmatprep.mubr.f32.mxu0 0.0
      %343 = vmatmul.mubr.f32.gmra.mxu0 %v163
      %v344 = vpop.f32.mrf.mxu0
      %v345 = vadd.f32 %v270, %v344
      %v346 = vpop.f32.mrf.mxu0
      %347 = vdwg.mxu0
      %v348 = vld [vmem:[%s5] sm:$0x1]
      %v350 = vlaneseq
      %v351 = vshrl.u32 %v350, 7
      %v352 = vsub.s32 0, %v351
      %v353 = vrot.slane %v348, %v352
      %v355 = vadd.f32 %v340, %v353
      %v356 = vadd.f32 %v345, %v353
      %v357 = vmax.f32 %v355, 0.0
      %v358 = vmax.f32 %v356, 0.0
      %v359 = vld [vmem:[%s6] sm:$0xff]
      %v360 = vld [vmem:[%s6 + $0x8] sm:$0xff]
      %v361 = vld [vmem:[%s6 + $0x10] sm:$0xff]
      %v362 = vld [vmem:[%s6 + $0x18] sm:$0xff]
      %v363 = vld [vmem:[%s6 + $0x20] sm:$0xff]
      %v364 = vld [vmem:[%s6 + $0x28] sm:$0xff]
      %v365 = vld [vmem:[%s6 + $0x30] sm:$0xff]
      %v366 = vld [vmem:[%s6 + $0x38] sm:$0xff]
      %v367 = vld [vmem:[%s6 + $0x40] sm:$0xff]
      %v368 = vld [vmem:[%s6 + $0x48] sm:$0xff]
      %v369 = vld [vmem:[%s6 + $0x50] sm:$0xff]
      %v370 = vld [vmem:[%s6 + $0x58] sm:$0xff]
      %v371 = vld [vmem:[%s6 + $0x60] sm:$0xff]
      %v372 = vld [vmem:[%s6 + $0x68] sm:$0xff]
      %v373 = vld [vmem:[%s6 + $0x70] sm:$0xff]
      %v374 = vld [vmem:[%s6 + $0x78] sm:$0xff]
      %v375 = vld [vmem:[%s7] sm:$0x1]
      %v377 = vlaneseq
      %v378 = vshrl.u32 %v377, 7
      %v379 = vsub.s32 0, %v378
      %v380 = vrot.slane %v375, %v379
      %382 = vmatprep.subr.mxu0 0.0
      %383 = vmatpush1.msra.mxu0 %v374
      %384 = vmatprep.subr.mxu0 0.0
      %385 = vmatpush1.msra.mxu0 %v373
      %386 = vmatprep.subr.mxu0 0.0
      %387 = vmatpush1.msra.mxu0 %v372
      %388 = vmatprep.subr.mxu0 0.0
      %389 = vmatpush1.msra.mxu0 %v371
      %390 = vmatprep.subr.mxu0 0.0
      %391 = vmatpush1.msra.mxu0 %v370
      %392 = vmatprep.subr.mxu0 0.0
      %393 = vmatpush1.msra.mxu0 %v369
      %394 = vmatprep.subr.mxu0 0.0
      %395 = vmatpush1.msra.mxu0 %v368
      %396 = vmatprep.subr.mxu0 0.0
      %397 = vmatpush1.msra.mxu0 %v367
      %398 = vmatprep.subr.mxu0 0.0
      %399 = vmatpush1.msra.mxu0 %v366
      %400 = vmatprep.subr.mxu0 0.0
      %401 = vmatpush1.msra.mxu0 %v365
      %402 = vmatprep.subr.mxu0 0.0
      %403 = vmatpush1.msra.mxu0 %v364
      %404 = vmatprep.subr.mxu0 0.0
      %405 = vmatpush1.msra.mxu0 %v363
      %406 = vmatprep.subr.mxu0 0.0
      %407 = vmatpush1.msra.mxu0 %v362
      %408 = vmatprep.subr.mxu0 0.0
      %409 = vmatpush1.msra.mxu0 %v361
      %410 = vmatprep.subr.mxu0 0.0
      %411 = vmatpush1.msra.mxu0 %v360
      %412 = vmatprep.subr.mxu0 0.0
      %413 = vmatpush1.msra.mxu0 %v359
      %414 = vmatprep.subr.mxu0 0.0
      %415 = vmatpush2.msra.mxu0 0.0
      %416 = vmatprep.subr.mxu0 0.0
      %417 = vmatpush2.msra.mxu0 0.0
      %418 = vmatprep.subr.mxu0 0.0
      %419 = vmatpush2.msra.mxu0 0.0
      %420 = vmatprep.subr.mxu0 0.0
      %421 = vmatpush2.msra.mxu0 0.0
      %422 = vmatprep.subr.mxu0 0.0
      %423 = vmatpush2.msra.mxu0 0.0
      %424 = vmatprep.subr.mxu0 0.0
      %425 = vmatpush2.msra.mxu0 0.0
      %426 = vmatprep.subr.mxu0 0.0
      %427 = vmatpush2.msra.mxu0 0.0
      %428 = vmatprep.subr.mxu0 0.0
      %429 = vmatpush2.msra.mxu0 0.0
      %430 = vmatprep.subr.mxu0 0.0
      %431 = vmatpush2.msra.mxu0 0.0
      %432 = vmatprep.subr.mxu0 0.0
      %433 = vmatpush2.msra.mxu0 0.0
      %434 = vmatprep.subr.mxu0 0.0
      %435 = vmatpush2.msra.mxu0 0.0
      %436 = vmatprep.subr.mxu0 0.0
      %437 = vmatpush2.msra.mxu0 0.0
      %438 = vmatprep.subr.mxu0 0.0
      %439 = vmatpush2.msra.mxu0 0.0
      %440 = vmatprep.subr.mxu0 0.0
      %441 = vmatpush2.msra.mxu0 0.0
      %442 = vmatprep.subr.mxu0 0.0
      %443 = vmatpush2.msra.mxu0 0.0
      %444 = vmatprep.subr.mxu0 0.0
      %445 = vmatpush2.msra.mxu0 0.0
      %446 = vmatprep.mubr.f32.mxu0 0.0
      %447 = vmatmul.mubr.f32.gmra.mxu0 %v357
      %v448 = vpop.f32.mrf.mxu0
      %v449 = vadd.f32 %v380, %v448
      %v450 = vpop.f32.mrf.mxu0
      %451 = vmatprep.mubr.f32.mxu0 0.0
      %452 = vmatmul.mubr.f32.gmra.mxu0 %v358
      %v453 = vpop.f32.mrf.mxu0
      %v454 = vadd.f32 %v380, %v453
      %v455 = vpop.f32.mrf.mxu0
      %456 = vdwg.mxu0
      %457 = vst [vmem:[#allocation3] sm:$0xff] %v449
      %458 = vst [vmem:[#allocation3 + $0x8] sm:$0xff] %v454
    $region41: #{gsn_sparse_forward.3} parent=1 // pred_fallthru
      _
    // Predicated region
    $region42: #{gsn_sparse_forward.3} parent=1 // pred_check
      _
    $region43: #{gsn_sparse_forward.3} parent=1 // pred_check_branch
      %460 = sbr.rel (0) target = $region45
    $region44: #{gsn_sparse_forward.3} parent=1 // pred_region
      %s462 = ssub.s32 256, 256
      %463 = vsyncadd [#allocation4], %s462
      %s464 = sshll.u32 [#allocation3], 4
      %s465 = int_to_ptr.vmem [resolvable:$true] %s464
      %470 = dma.vmem_to_hbm [thread:$0]  %s465, 256, %s8, [#allocation4], 128, 128, 8
    $region45: #{gsn_sparse_forward.3} parent=1 // pred_fallthru
      _
    // Predicated region
    $region46: #{gsn_sparse_forward.3} parent=1 // pred_check
      _
    $region47: #{gsn_sparse_forward.3} parent=1 // pred_check_branch
      %472 = sbr.rel (0) target = $region49
    $region48: #{gsn_sparse_forward.3} parent=1 // pred_region
      %473 = dma.done [#allocation4], 256
    $region49: #{gsn_sparse_forward.3} parent=1 // pred_fallthru
      _
    %474 = vsyncpa [#allocation4], 1

// kernel: gsn_sparse_forward.2
$region0: #{gsn_sparse_forward.2}
  #allocation0 [shape = 'u32[]', space=smem, size = 0x4, offset = 0x4, fixed_abs, tag = 'smem constant byte address 0x4 - core index']
  #allocation1 [shape = 'u32[144,128]{1,0:T(1,128)}', space=vmem, size = 0x12000, scoped, tag = 'internal scratch']
  #allocation2 [shape = 'f32[128,128]{1,0:T(8,128)}', space=vmem, size = 0x10000, scoped, tag = 'scratch operand']
  #allocation3 [shape = 'f32[128,128]{1,0:T(8,128)}', space=vmem, size = 0x10000, scoped, tag = 'scratch operand']
  #allocation4 [shape = 's32[1]{0}', space=sflag, size = 0x4, scoped, tag = 'scoped memory for gsn_sparse_forward.2']
  #allocation5 [shape = 'u8[512]{0}', space=smem, size = 0x200, scoped, tag = 'prefetched SMEM operand 0']
  #allocation6 [shape = 'u8[512]{0}', space=smem, size = 0x200, scoped, tag = 'prefetched SMEM operand 1']
  %s0 = inlined_call_operand.vmem [shape: s32[128], index: 0, kind: input, shape index: {}]
  %s1 = inlined_call_operand.vmem [shape: s32[128], index: 1, kind: input, shape index: {}]
  %s2 = inlined_call_operand.vmem [shape: f32[16,128], index: 2, kind: input, shape index: {}]
  %s3 = inlined_call_operand.vmem [shape: f32[128,128], index: 3, kind: input, shape index: {}]
  %s4 = inlined_call_operand.vmem [shape: f32[128,128], index: 4, kind: input, shape index: {}]
  %s5 = inlined_call_operand.vmem [shape: f32[1,128], index: 5, kind: input, shape index: {}]
  %s6 = inlined_call_operand.vmem [shape: f32[128,128], index: 6, kind: input, shape index: {}]
  %s7 = inlined_call_operand.vmem [shape: f32[1,128], index: 7, kind: input, shape index: {}]
  %s8 = inlined_call_operand.vmem [shape: f32[128,128], index: 8, kind: output, shape index: {}]
  %s9 = sld [smem:[#allocation0]]
  $region41: #{gsn_sparse_forward.2} parent=0
    _
  %s11 = ssub.s32 1, %s9
  %s12 = scalar_select 0, %s11, %s9
  %s13 = sshll.u32 %s0, 4
  %s14 = int_to_ptr.vmem [resolvable:$true] %s13
  %16 = dma.vmem_to_smem %s14, 16, [#allocation5], [#allocation4]
  %s17 = sshll.u32 %s1, 4
  %s18 = int_to_ptr.vmem [resolvable:$true] %s17
  %20 = dma.vmem_to_smem %s18, 16, [#allocation6], [#allocation4]
  %21 = dma.done [#allocation4], 32
  %22 = sfence
  // Predicated region
  $region2: #{gsn_sparse_forward.2} parent=0 // pred_check
    _
  $region3: #{gsn_sparse_forward.2} parent=0 // pred_check_branch
    %24 = sbr.rel (0) target = $region5
  $region4: #{gsn_sparse_forward.2} parent=0 // pred_region
    _
  $region5: #{gsn_sparse_forward.2} parent=0 // pred_fallthru
    _
  // Predicated region
  $region6: #{gsn_sparse_forward.2} parent=0 // pred_check
    _
  $region7: #{gsn_sparse_forward.2} parent=0 // pred_check_branch
    %26 = sbr.rel (0) target = $region9
  $region8: #{gsn_sparse_forward.2} parent=0 // pred_region
    _
  $region9: #{gsn_sparse_forward.2} parent=0 // pred_fallthru
    _
  // Predicated region
  $region10: #{gsn_sparse_forward.2} parent=0 // pred_check
    _
  $region11: #{gsn_sparse_forward.2} parent=0 // pred_check_branch
    %28 = sbr.rel (0) target = $region13
  $region12: #{gsn_sparse_forward.2} parent=0 // pred_region
    _
  $region13: #{gsn_sparse_forward.2} parent=0 // pred_fallthru
    _
  // Predicated region
  $region14: #{gsn_sparse_forward.2} parent=0 // pred_check
    _
  $region15: #{gsn_sparse_forward.2} parent=0 // pred_check_branch
    %30 = sbr.rel (0) target = $region17
  $region16: #{gsn_sparse_forward.2} parent=0 // pred_region
    _
  $region17: #{gsn_sparse_forward.2} parent=0 // pred_fallthru
    _
  // Predicated region
  $region18: #{gsn_sparse_forward.2} parent=0 // pred_check
    _
  $region19: #{gsn_sparse_forward.2} parent=0 // pred_check_branch
    %32 = sbr.rel (0) target = $region21
  $region20: #{gsn_sparse_forward.2} parent=0 // pred_region
    _
  $region21: #{gsn_sparse_forward.2} parent=0 // pred_fallthru
    _
  // Predicated region
  $region22: #{gsn_sparse_forward.2} parent=0 // pred_check
    _
  $region23: #{gsn_sparse_forward.2} parent=0 // pred_check_branch
    %34 = sbr.rel (0) target = $region25
  $region24: #{gsn_sparse_forward.2} parent=0 // pred_region
    _
  $region25: #{gsn_sparse_forward.2} parent=0 // pred_fallthru
    _
  %s35 = smul.u32 0, 128
  loop: start=0, step=1, limit=128
  $region26: #{gsn_sparse_forward.2} parent=0 // loop_pre_header
    _
  $region27: #{gsn_sparse_forward.2} parent=0 // loop_header
    %s37 = sphi 0, %s41
    %p38 = scmp.ge.s32.totalorder %s37, 128
  $region28: #{gsn_sparse_forward.2} parent=0 // loop_header_branch
    %40 = sbr.rel (%p38) target = $region32
  $region29: #{gsn_sparse_forward.2} parent=0 // loop_body
    %s42 = sadd.s32 %s35, %s37
    %s43 = sld [smem:[#allocation6 + %s42]]
    %s44 = sld [smem:[#allocation5 + %s42]]
    %s45 = scalar_lea.vmem %s2, %s43
    %v46 = vld [vmem:[%s45] sm:$0x1]
    %s47 = scalar_lea.vmem [#allocation2], %s37
    %48 = vst [vmem:[%s47] sm:$0x1] %v46
    %s49 = scalar_lea.vmem %s2, %s44
    %v50 = vld [vmem:[%s49] sm:$0x1]
    %s51 = scalar_lea.vmem [#allocation3], %s37
    %52 = vst [vmem:[%s51] sm:$0x1] %v50
  $region30: #{gsn_sparse_forward.2} parent=0 // loop_footer
    %s41 = sadd.s32 1, %s37
  $region31: #{gsn_sparse_forward.2} parent=0 // loop_footer_branch
    %36 = sbr.rel target = $region27
  $region32: #{gsn_sparse_forward.2} parent=0 // loop_exit
    _
  %v53 = vld [vmem:[#allocation2] sm:$0xff]
  %v54 = vld [vmem:[#allocation2 + $0x8] sm:$0xff]
  %v55 = vld [vmem:[#allocation2 + $0x10] sm:$0xff]
  %v56 = vld [vmem:[#allocation2 + $0x18] sm:$0xff]
  %v57 = vld [vmem:[#allocation2 + $0x20] sm:$0xff]
  %v58 = vld [vmem:[#allocation2 + $0x28] sm:$0xff]
  %v59 = vld [vmem:[#allocation2 + $0x30] sm:$0xff]
  %v60 = vld [vmem:[#allocation2 + $0x38] sm:$0xff]
  %v61 = vld [vmem:[#allocation2 + $0x40] sm:$0xff]
  %v62 = vld [vmem:[#allocation2 + $0x48] sm:$0xff]
  %v63 = vld [vmem:[#allocation2 + $0x50] sm:$0xff]
  %v64 = vld [vmem:[#allocation2 + $0x58] sm:$0xff]
  %v65 = vld [vmem:[#allocation2 + $0x60] sm:$0xff]
  %v66 = vld [vmem:[#allocation2 + $0x68] sm:$0xff]
  %v67 = vld [vmem:[#allocation2 + $0x70] sm:$0xff]
  %v68 = vld [vmem:[#allocation2 + $0x78] sm:$0xff]
  %v69 = vld [vmem:[%s3] sm:$0xff]
  %v70 = vld [vmem:[%s3 + $0x8] sm:$0xff]
  %v71 = vld [vmem:[%s3 + $0x10] sm:$0xff]
  %v72 = vld [vmem:[%s3 + $0x18] sm:$0xff]
  %v73 = vld [vmem:[%s3 + $0x20] sm:$0xff]
  %v74 = vld [vmem:[%s3 + $0x28] sm:$0xff]
  %v75 = vld [vmem:[%s3 + $0x30] sm:$0xff]
  %v76 = vld [vmem:[%s3 + $0x38] sm:$0xff]
  %v77 = vld [vmem:[%s3 + $0x40] sm:$0xff]
  %v78 = vld [vmem:[%s3 + $0x48] sm:$0xff]
  %v79 = vld [vmem:[%s3 + $0x50] sm:$0xff]
  %v80 = vld [vmem:[%s3 + $0x58] sm:$0xff]
  %v81 = vld [vmem:[%s3 + $0x60] sm:$0xff]
  %v82 = vld [vmem:[%s3 + $0x68] sm:$0xff]
  %v83 = vld [vmem:[%s3 + $0x70] sm:$0xff]
  %v84 = vld [vmem:[%s3 + $0x78] sm:$0xff]
  %v85 = vld [vmem:[#allocation3] sm:$0xff]
  %v86 = vld [vmem:[#allocation3 + $0x8] sm:$0xff]
  %v87 = vld [vmem:[#allocation3 + $0x10] sm:$0xff]
  %v88 = vld [vmem:[#allocation3 + $0x18] sm:$0xff]
  %v89 = vld [vmem:[#allocation3 + $0x20] sm:$0xff]
  %v90 = vld [vmem:[#allocation3 + $0x28] sm:$0xff]
  %v91 = vld [vmem:[#allocation3 + $0x30] sm:$0xff]
  %v92 = vld [vmem:[#allocation3 + $0x38] sm:$0xff]
  %v93 = vld [vmem:[#allocation3 + $0x40] sm:$0xff]
  %v94 = vld [vmem:[#allocation3 + $0x48] sm:$0xff]
  %v95 = vld [vmem:[#allocation3 + $0x50] sm:$0xff]
  %v96 = vld [vmem:[#allocation3 + $0x58] sm:$0xff]
  %v97 = vld [vmem:[#allocation3 + $0x60] sm:$0xff]
  %v98 = vld [vmem:[#allocation3 + $0x68] sm:$0xff]
  %v99 = vld [vmem:[#allocation3 + $0x70] sm:$0xff]
  %v100 = vld [vmem:[#allocation3 + $0x78] sm:$0xff]
  %v101 = vld [vmem:[%s4] sm:$0xff]
  %v102 = vld [vmem:[%s4 + $0x8] sm:$0xff]
  %v103 = vld [vmem:[%s4 + $0x10] sm:$0xff]
  %v104 = vld [vmem:[%s4 + $0x18] sm:$0xff]
  %v105 = vld [vmem:[%s4 + $0x20] sm:$0xff]
  %v106 = vld [vmem:[%s4 + $0x28] sm:$0xff]
  %v107 = vld [vmem:[%s4 + $0x30] sm:$0xff]
  %v108 = vld [vmem:[%s4 + $0x38] sm:$0xff]
  %v109 = vld [vmem:[%s4 + $0x40] sm:$0xff]
  %v110 = vld [vmem:[%s4 + $0x48] sm:$0xff]
  %v111 = vld [vmem:[%s4 + $0x50] sm:$0xff]
  %v112 = vld [vmem:[%s4 + $0x58] sm:$0xff]
  %v113 = vld [vmem:[%s4 + $0x60] sm:$0xff]
  %v114 = vld [vmem:[%s4 + $0x68] sm:$0xff]
  %v115 = vld [vmem:[%s4 + $0x70] sm:$0xff]
  %v116 = vld [vmem:[%s4 + $0x78] sm:$0xff]
  %117 = vmatprep.subr.mxu0 0.0
  %118 = vmatpush1.msra.mxu0 %v116
  %119 = vmatprep.subr.mxu0 0.0
  %120 = vmatpush1.msra.mxu0 %v115
  %121 = vmatprep.subr.mxu0 0.0
  %122 = vmatpush1.msra.mxu0 %v114
  %123 = vmatprep.subr.mxu0 0.0
  %124 = vmatpush1.msra.mxu0 %v113
  %125 = vmatprep.subr.mxu0 0.0
  %126 = vmatpush1.msra.mxu0 %v112
  %127 = vmatprep.subr.mxu0 0.0
  %128 = vmatpush1.msra.mxu0 %v111
  %129 = vmatprep.subr.mxu0 0.0
  %130 = vmatpush1.msra.mxu0 %v110
  %131 = vmatprep.subr.mxu0 0.0
  %132 = vmatpush1.msra.mxu0 %v109
  %133 = vmatprep.subr.mxu0 0.0
  %134 = vmatpush1.msra.mxu0 %v108
  %135 = vmatprep.subr.mxu0 0.0
  %136 = vmatpush1.msra.mxu0 %v107
  %137 = vmatprep.subr.mxu0 0.0
  %138 = vmatpush1.msra.mxu0 %v106
  %139 = vmatprep.subr.mxu0 0.0
  %140 = vmatpush1.msra.mxu0 %v105
  %141 = vmatprep.subr.mxu0 0.0
  %142 = vmatpush1.msra.mxu0 %v104
  %143 = vmatprep.subr.mxu0 0.0
  %144 = vmatpush1.msra.mxu0 %v103
  %145 = vmatprep.subr.mxu0 0.0
  %146 = vmatpush1.msra.mxu0 %v102
  %147 = vmatprep.subr.mxu0 0.0
  %148 = vmatpush1.msra.mxu0 %v101
  %149 = vmatprep.subr.mxu0 0.0
  %150 = vmatpush2.msra.mxu0 0.0
  %151 = vmatprep.subr.mxu0 0.0
  %152 = vmatpush2.msra.mxu0 0.0
  %153 = vmatprep.subr.mxu0 0.0
  %154 = vmatpush2.msra.mxu0 0.0
  %155 = vmatprep.subr.mxu0 0.0
  %156 = vmatpush2.msra.mxu0 0.0
  %157 = vmatprep.subr.mxu0 0.0
  %158 = vmatpush2.msra.mxu0 0.0
  %159 = vmatprep.subr.mxu0 0.0
  %160 = vmatpush2.msra.mxu0 0.0
  %161 = vmatprep.subr.mxu0 0.0
  %162 = vmatpush2.msra.mxu0 0.0
  %163 = vmatprep.subr.mxu0 0.0
  %164 = vmatpush2.msra.mxu0 0.0
  %165 = vmatprep.subr.mxu0 0.0
  %166 = vmatpush2.msra.mxu0 0.0
  %167 = vmatprep.subr.mxu0 0.0
  %168 = vmatpush2.msra.mxu0 0.0
  %169 = vmatprep.subr.mxu0 0.0
  %170 = vmatpush2.msra.mxu0 0.0
  %171 = vmatprep.subr.mxu0 0.0
  %172 = vmatpush2.msra.mxu0 0.0
  %173 = vmatprep.subr.mxu0 0.0
  %174 = vmatpush2.msra.mxu0 0.0
  %175 = vmatprep.subr.mxu0 0.0
  %176 = vmatpush2.msra.mxu0 0.0
  %177 = vmatprep.subr.mxu0 0.0
  %178 = vmatpush2.msra.mxu0 0.0
  %179 = vmatprep.subr.mxu0 0.0
  %180 = vmatpush2.msra.mxu0 0.0
  %181 = vmatprep.mubr.f32.mxu0 0.0
  %182 = vmatmul.mubr.f32.gmra.mxu0 %v85
  %v183 = vpop.f32.mrf.mxu0
  %v184 = vadd.f32 0.0, %v183
  %v185 = vpop.f32.mrf.mxu0
  %186 = vmatprep.mubr.f32.mxu0 0.0
  %187 = vmatmul.mubr.f32.gmra.mxu0 %v86
  %v188 = vpop.f32.mrf.mxu0
  %v189 = vadd.f32 0.0, %v188
  %v190 = vpop.f32.mrf.mxu0
  %191 = vmatprep.mubr.f32.mxu0 0.0
  %192 = vmatmul.mubr.f32.gmra.mxu0 %v87
  %v193 = vpop.f32.mrf.mxu0
  %v194 = vadd.f32 0.0, %v193
  %v195 = vpop.f32.mrf.mxu0
  %196 = vmatprep.mubr.f32.mxu0 0.0
  %197 = vmatmul.mubr.f32.gmra.mxu0 %v88
  %v198 = vpop.f32.mrf.mxu0
  %v199 = vadd.f32 0.0, %v198
  %v200 = vpop.f32.mrf.mxu0
  %201 = vmatprep.mubr.f32.mxu0 0.0
  %202 = vmatmul.mubr.f32.gmra.mxu0 %v89
  %v203 = vpop.f32.mrf.mxu0
  %v204 = vadd.f32 0.0, %v203
  %v205 = vpop.f32.mrf.mxu0
  %206 = vmatprep.mubr.f32.mxu0 0.0
  %207 = vmatmul.mubr.f32.gmra.mxu0 %v90
  %v208 = vpop.f32.mrf.mxu0
  %v209 = vadd.f32 0.0, %v208
  %v210 = vpop.f32.mrf.mxu0
  %211 = vmatprep.mubr.f32.mxu0 0.0
  %212 = vmatmul.mubr.f32.gmra.mxu0 %v91
  %v213 = vpop.f32.mrf.mxu0
  %v214 = vadd.f32 0.0, %v213
  %v215 = vpop.f32.mrf.mxu0
  %216 = vmatprep.mubr.f32.mxu0 0.0
  %217 = vmatmul.mubr.f32.gmra.mxu0 %v92
  %v218 = vpop.f32.mrf.mxu0
  %v219 = vadd.f32 0.0, %v218
  %v220 = vpop.f32.mrf.mxu0
  %221 = vmatprep.mubr.f32.mxu0 0.0
  %222 = vmatmul.mubr.f32.gmra.mxu0 %v93
  %v223 = vpop.f32.mrf.mxu0
  %v224 = vadd.f32 0.0, %v223
  %v225 = vpop.f32.mrf.mxu0
  %226 = vmatprep.mubr.f32.mxu0 0.0
  %227 = vmatmul.mubr.f32.gmra.mxu0 %v94
  %v228 = vpop.f32.mrf.mxu0
  %v229 = vadd.f32 0.0, %v228
  %v230 = vpop.f32.mrf.mxu0
  %231 = vmatprep.mubr.f32.mxu0 0.0
  %232 = vmatmul.mubr.f32.gmra.mxu0 %v95
  %v233 = vpop.f32.mrf.mxu0
  %v234 = vadd.f32 0.0, %v233
  %v235 = vpop.f32.mrf.mxu0
  %236 = vmatprep.mubr.f32.mxu0 0.0
  %237 = vmatmul.mubr.f32.gmra.mxu0 %v96
  %v238 = vpop.f32.mrf.mxu0
  %v239 = vadd.f32 0.0, %v238
  %v240 = vpop.f32.mrf.mxu0
  %241 = vmatprep.mubr.f32.mxu0 0.0
  %242 = vmatmul.mubr.f32.gmra.mxu0 %v97
  %v243 = vpop.f32.mrf.mxu0
  %v244 = vadd.f32 0.0, %v243
  %v245 = vpop.f32.mrf.mxu0
  %246 = vmatprep.mubr.f32.mxu0 0.0
  %247 = vmatmul.mubr.f32.gmra.mxu0 %v98
  %v248 = vpop.f32.mrf.mxu0
  %v249 = vadd.f32 0.0, %v248
  %v250 = vpop.f32.mrf.mxu0
  %251 = vmatprep.mubr.f32.mxu0 0.0
  %252 = vmatmul.mubr.f32.gmra.mxu0 %v99
  %v253 = vpop.f32.mrf.mxu0
  %v254 = vadd.f32 0.0, %v253
  %v255 = vpop.f32.mrf.mxu0
  %256 = vmatprep.mubr.f32.mxu0 0.0
  %257 = vmatmul.mubr.f32.gmra.mxu0 %v100
  %v258 = vpop.f32.mrf.mxu0
  %v259 = vadd.f32 0.0, %v258
  %v260 = vpop.f32.mrf.mxu0
  %261 = vdwg.mxu0
  %262 = vmatprep.subr.mxu0 0.0
  %263 = vmatpush1.msra.mxu0 %v84
  %264 = vmatprep.subr.mxu0 0.0
  %265 = vmatpush1.msra.mxu0 %v83
  %266 = vmatprep.subr.mxu0 0.0
  %267 = vmatpush1.msra.mxu0 %v82
  %268 = vmatprep.subr.mxu0 0.0
  %269 = vmatpush1.msra.mxu0 %v81
  %270 = vmatprep.subr.mxu0 0.0
  %271 = vmatpush1.msra.mxu0 %v80
  %272 = vmatprep.subr.mxu0 0.0
  %273 = vmatpush1.msra.mxu0 %v79
  %274 = vmatprep.subr.mxu0 0.0
  %275 = vmatpush1.msra.mxu0 %v78
  %276 = vmatprep.subr.mxu0 0.0
  %277 = vmatpush1.msra.mxu0 %v77
  %278 = vmatprep.subr.mxu0 0.0
  %279 = vmatpush1.msra.mxu0 %v76
  %280 = vmatprep.subr.mxu0 0.0
  %281 = vmatpush1.msra.mxu0 %v75
  %282 = vmatprep.subr.mxu0 0.0
  %283 = vmatpush1.msra.mxu0 %v74
  %284 = vmatprep.subr.mxu0 0.0
  %285 = vmatpush1.msra.mxu0 %v73
  %286 = vmatprep.subr.mxu0 0.0
  %287 = vmatpush1.msra.mxu0 %v72
  %288 = vmatprep.subr.mxu0 0.0
  %289 = vmatpush1.msra.mxu0 %v71
  %290 = vmatprep.subr.mxu0 0.0
  %291 = vmatpush1.msra.mxu0 %v70
  %292 = vmatprep.subr.mxu0 0.0
  %293 = vmatpush1.msra.mxu0 %v69
  %294 = vmatprep.subr.mxu0 0.0
  %295 = vmatpush2.msra.mxu0 0.0
  %296 = vmatprep.subr.mxu0 0.0
  %297 = vmatpush2.msra.mxu0 0.0
  %298 = vmatprep.subr.mxu0 0.0
  %299 = vmatpush2.msra.mxu0 0.0
  %300 = vmatprep.subr.mxu0 0.0
  %301 = vmatpush2.msra.mxu0 0.0
  %302 = vmatprep.subr.mxu0 0.0
  %303 = vmatpush2.msra.mxu0 0.0
  %304 = vmatprep.subr.mxu0 0.0
  %305 = vmatpush2.msra.mxu0 0.0
  %306 = vmatprep.subr.mxu0 0.0
  %307 = vmatpush2.msra.mxu0 0.0
  %308 = vmatprep.subr.mxu0 0.0
  %309 = vmatpush2.msra.mxu0 0.0
  %310 = vmatprep.subr.mxu0 0.0
  %311 = vmatpush2.msra.mxu0 0.0
  %312 = vmatprep.subr.mxu0 0.0
  %313 = vmatpush2.msra.mxu0 0.0
  %314 = vmatprep.subr.mxu0 0.0
  %315 = vmatpush2.msra.mxu0 0.0
  %316 = vmatprep.subr.mxu0 0.0
  %317 = vmatpush2.msra.mxu0 0.0
  %318 = vmatprep.subr.mxu0 0.0
  %319 = vmatpush2.msra.mxu0 0.0
  %320 = vmatprep.subr.mxu0 0.0
  %321 = vmatpush2.msra.mxu0 0.0
  %322 = vmatprep.subr.mxu0 0.0
  %323 = vmatpush2.msra.mxu0 0.0
  %324 = vmatprep.subr.mxu0 0.0
  %325 = vmatpush2.msra.mxu0 0.0
  %326 = vmatprep.mubr.f32.mxu0 0.0
  %327 = vmatmul.mubr.f32.gmra.mxu0 %v53
  %v328 = vpop.f32.mrf.mxu0
  %v329 = vadd.f32 %v184, %v328
  %v330 = vpop.f32.mrf.mxu0
  %331 = vmatprep.mubr.f32.mxu0 0.0
  %332 = vmatmul.mubr.f32.gmra.mxu0 %v54
  %v333 = vpop.f32.mrf.mxu0
  %v334 = vadd.f32 %v189, %v333
  %v335 = vpop.f32.mrf.mxu0
  %336 = vmatprep.mubr.f32.mxu0 0.0
  %337 = vmatmul.mubr.f32.gmra.mxu0 %v55
  %v338 = vpop.f32.mrf.mxu0
  %v339 = vadd.f32 %v194, %v338
  %v340 = vpop.f32.mrf.mxu0
  %341 = vmatprep.mubr.f32.mxu0 0.0
  %342 = vmatmul.mubr.f32.gmra.mxu0 %v56
  %v343 = vpop.f32.mrf.mxu0
  %v344 = vadd.f32 %v199, %v343
  %v345 = vpop.f32.mrf.mxu0
  %346 = vmatprep.mubr.f32.mxu0 0.0
  %347 = vmatmul.mubr.f32.gmra.mxu0 %v57
  %v348 = vpop.f32.mrf.mxu0
  %v349 = vadd.f32 %v204, %v348
  %v350 = vpop.f32.mrf.mxu0
  %351 = vmatprep.mubr.f32.mxu0 0.0
  %352 = vmatmul.mubr.f32.gmra.mxu0 %v58
  %v353 = vpop.f32.mrf.mxu0
  %v354 = vadd.f32 %v209, %v353
  %v355 = vpop.f32.mrf.mxu0
  %356 = vmatprep.mubr.f32.mxu0 0.0
  %357 = vmatmul.mubr.f32.gmra.mxu0 %v59
  %v358 = vpop.f32.mrf.mxu0
  %v359 = vadd.f32 %v214, %v358
  %v360 = vpop.f32.mrf.mxu0
  %361 = vmatprep.mubr.f32.mxu0 0.0
  %362 = vmatmul.mubr.f32.gmra.mxu0 %v60
  %v363 = vpop.f32.mrf.mxu0
  %v364 = vadd.f32 %v219, %v363
  %v365 = vpop.f32.mrf.mxu0
  %366 = vmatprep.mubr.f32.mxu0 0.0
  %367 = vmatmul.mubr.f32.gmra.mxu0 %v61
  %v368 = vpop.f32.mrf.mxu0
  %v369 = vadd.f32 %v224, %v368
  %v370 = vpop.f32.mrf.mxu0
  %371 = vmatprep.mubr.f32.mxu0 0.0
  %372 = vmatmul.mubr.f32.gmra.mxu0 %v62
  %v373 = vpop.f32.mrf.mxu0
  %v374 = vadd.f32 %v229, %v373
  %v375 = vpop.f32.mrf.mxu0
  %376 = vmatprep.mubr.f32.mxu0 0.0
  %377 = vmatmul.mubr.f32.gmra.mxu0 %v63
  %v378 = vpop.f32.mrf.mxu0
  %v379 = vadd.f32 %v234, %v378
  %v380 = vpop.f32.mrf.mxu0
  %381 = vmatprep.mubr.f32.mxu0 0.0
  %382 = vmatmul.mubr.f32.gmra.mxu0 %v64
  %v383 = vpop.f32.mrf.mxu0
  %v384 = vadd.f32 %v239, %v383
  %v385 = vpop.f32.mrf.mxu0
  %386 = vmatprep.mubr.f32.mxu0 0.0
  %387 = vmatmul.mubr.f32.gmra.mxu0 %v65
  %v388 = vpop.f32.mrf.mxu0
  %v389 = vadd.f32 %v244, %v388
  %v390 = vpop.f32.mrf.mxu0
  %391 = vmatprep.mubr.f32.mxu0 0.0
  %392 = vmatmul.mubr.f32.gmra.mxu0 %v66
  %v393 = vpop.f32.mrf.mxu0
  %v394 = vadd.f32 %v249, %v393
  %v395 = vpop.f32.mrf.mxu0
  %396 = vmatprep.mubr.f32.mxu0 0.0
  %397 = vmatmul.mubr.f32.gmra.mxu0 %v67
  %v398 = vpop.f32.mrf.mxu0
  %v399 = vadd.f32 %v254, %v398
  %v400 = vpop.f32.mrf.mxu0
  %401 = vmatprep.mubr.f32.mxu0 0.0
  %402 = vmatmul.mubr.f32.gmra.mxu0 %v68
  %v403 = vpop.f32.mrf.mxu0
  %v404 = vadd.f32 %v259, %v403
  %v405 = vpop.f32.mrf.mxu0
  %406 = vdwg.mxu0
  %v407 = vld [vmem:[%s5] sm:$0x1]
  %v409 = vlaneseq
  %v410 = vshrl.u32 %v409, 7
  %v411 = vsub.s32 0, %v410
  %v412 = vrot.slane %v407, %v411
  %v414 = vadd.f32 %v329, %v412
  %v415 = vadd.f32 %v334, %v412
  %v416 = vadd.f32 %v339, %v412
  %v417 = vadd.f32 %v344, %v412
  %v418 = vadd.f32 %v349, %v412
  %v419 = vadd.f32 %v354, %v412
  %v420 = vadd.f32 %v359, %v412
  %v421 = vadd.f32 %v364, %v412
  %v422 = vadd.f32 %v369, %v412
  %v423 = vadd.f32 %v374, %v412
  %v424 = vadd.f32 %v379, %v412
  %v425 = vadd.f32 %v384, %v412
  %v426 = vadd.f32 %v389, %v412
  %v427 = vadd.f32 %v394, %v412
  %v428 = vadd.f32 %v399, %v412
  %v429 = vadd.f32 %v404, %v412
  %v430 = vmax.f32 %v414, 0.0
  %v431 = vmax.f32 %v415, 0.0
  %v432 = vmax.f32 %v416, 0.0
  %v433 = vmax.f32 %v417, 0.0
  %v434 = vmax.f32 %v418, 0.0
  %v435 = vmax.f32 %v419, 0.0
  %v436 = vmax.f32 %v420, 0.0
  %v437 = vmax.f32 %v421, 0.0
  %v438 = vmax.f32 %v422, 0.0
  %v439 = vmax.f32 %v423, 0.0
  %v440 = vmax.f32 %v424, 0.0
  %v441 = vmax.f32 %v425, 0.0
  %v442 = vmax.f32 %v426, 0.0
  %v443 = vmax.f32 %v427, 0.0
  %v444 = vmax.f32 %v428, 0.0
  %v445 = vmax.f32 %v429, 0.0
  %v446 = vld [vmem:[%s6] sm:$0xff]
  %v447 = vld [vmem:[%s6 + $0x8] sm:$0xff]
  %v448 = vld [vmem:[%s6 + $0x10] sm:$0xff]
  %v449 = vld [vmem:[%s6 + $0x18] sm:$0xff]
  %v450 = vld [vmem:[%s6 + $0x20] sm:$0xff]
  %v451 = vld [vmem:[%s6 + $0x28] sm:$0xff]
  %v452 = vld [vmem:[%s6 + $0x30] sm:$0xff]
  %v453 = vld [vmem:[%s6 + $0x38] sm:$0xff]
  %v454 = vld [vmem:[%s6 + $0x40] sm:$0xff]
  %v455 = vld [vmem:[%s6 + $0x48] sm:$0xff]
  %v456 = vld [vmem:[%s6 + $0x50] sm:$0xff]
  %v457 = vld [vmem:[%s6 + $0x58] sm:$0xff]
  %v458 = vld [vmem:[%s6 + $0x60] sm:$0xff]
  %v459 = vld [vmem:[%s6 + $0x68] sm:$0xff]
  %v460 = vld [vmem:[%s6 + $0x70] sm:$0xff]
  %v461 = vld [vmem:[%s6 + $0x78] sm:$0xff]
  %v462 = vld [vmem:[%s7] sm:$0x1]
  %v464 = vlaneseq
  %v465 = vshrl.u32 %v464, 7
  %v466 = vsub.s32 0, %v465
  %v467 = vrot.slane %v462, %v466
  %469 = vmatprep.subr.mxu0 0.0
  %470 = vmatpush1.msra.mxu0 %v461
  %471 = vmatprep.subr.mxu0 0.0
  %472 = vmatpush1.msra.mxu0 %v460
  %473 = vmatprep.subr.mxu0 0.0
  %474 = vmatpush1.msra.mxu0 %v459
  %475 = vmatprep.subr.mxu0 0.0
  %476 = vmatpush1.msra.mxu0 %v458
  %477 = vmatprep.subr.mxu0 0.0
  %478 = vmatpush1.msra.mxu0 %v457
  %479 = vmatprep.subr.mxu0 0.0
  %480 = vmatpush1.msra.mxu0 %v456
  %481 = vmatprep.subr.mxu0 0.0
  %482 = vmatpush1.msra.mxu0 %v455
  %483 = vmatprep.subr.mxu0 0.0
  %484 = vmatpush1.msra.mxu0 %v454
  %485 = vmatprep.subr.mxu0 0.0
  %486 = vmatpush1.msra.mxu0 %v453
  %487 = vmatprep.subr.mxu0 0.0
  %488 = vmatpush1.msra.mxu0 %v452
  %489 = vmatprep.subr.mxu0 0.0
  %490 = vmatpush1.msra.mxu0 %v451
  %491 = vmatprep.subr.mxu0 0.0
  %492 = vmatpush1.msra.mxu0 %v450
  %493 = vmatprep.subr.mxu0 0.0
  %494 = vmatpush1.msra.mxu0 %v449
  %495 = vmatprep.subr.mxu0 0.0
  %496 = vmatpush1.msra.mxu0 %v448
  %497 = vmatprep.subr.mxu0 0.0
  %498 = vmatpush1.msra.mxu0 %v447
  %499 = vmatprep.subr.mxu0 0.0
  %500 = vmatpush1.msra.mxu0 %v446
  %501 = vmatprep.subr.mxu0 0.0
  %502 = vmatpush2.msra.mxu0 0.0
  %503 = vmatprep.subr.mxu0 0.0
  %504 = vmatpush2.msra.mxu0 0.0
  %505 = vmatprep.subr.mxu0 0.0
  %506 = vmatpush2.msra.mxu0 0.0
  %507 = vmatprep.subr.mxu0 0.0
  %508 = vmatpush2.msra.mxu0 0.0
  %509 = vmatprep.subr.mxu0 0.0
  %510 = vmatpush2.msra.mxu0 0.0
  %511 = vmatprep.subr.mxu0 0.0
  %512 = vmatpush2.msra.mxu0 0.0
  %513 = vmatprep.subr.mxu0 0.0
  %514 = vmatpush2.msra.mxu0 0.0
  %515 = vmatprep.subr.mxu0 0.0
  %516 = vmatpush2.msra.mxu0 0.0
  %517 = vmatprep.subr.mxu0 0.0
  %518 = vmatpush2.msra.mxu0 0.0
  %519 = vmatprep.subr.mxu0 0.0
  %520 = vmatpush2.msra.mxu0 0.0
  %521 = vmatprep.subr.mxu0 0.0
  %522 = vmatpush2.msra.mxu0 0.0
  %523 = vmatprep.subr.mxu0 0.0
  %524 = vmatpush2.msra.mxu0 0.0
  %525 = vmatprep.subr.mxu0 0.0
  %526 = vmatpush2.msra.mxu0 0.0
  %527 = vmatprep.subr.mxu0 0.0
  %528 = vmatpush2.msra.mxu0 0.0
  %529 = vmatprep.subr.mxu0 0.0
  %530 = vmatpush2.msra.mxu0 0.0
  %531 = vmatprep.subr.mxu0 0.0
  %532 = vmatpush2.msra.mxu0 0.0
  %533 = vmatprep.mubr.f32.mxu0 0.0
  %534 = vmatmul.mubr.f32.gmra.mxu0 %v430
  %v535 = vpop.f32.mrf.mxu0
  %v536 = vadd.f32 %v467, %v535
  %v537 = vpop.f32.mrf.mxu0
  %538 = vmatprep.mubr.f32.mxu0 0.0
  %539 = vmatmul.mubr.f32.gmra.mxu0 %v431
  %v540 = vpop.f32.mrf.mxu0
  %v541 = vadd.f32 %v467, %v540
  %v542 = vpop.f32.mrf.mxu0
  %543 = vmatprep.mubr.f32.mxu0 0.0
  %544 = vmatmul.mubr.f32.gmra.mxu0 %v432
  %v545 = vpop.f32.mrf.mxu0
  %v546 = vadd.f32 %v467, %v545
  %v547 = vpop.f32.mrf.mxu0
  %548 = vmatprep.mubr.f32.mxu0 0.0
  %549 = vmatmul.mubr.f32.gmra.mxu0 %v433
  %v550 = vpop.f32.mrf.mxu0
  %v551 = vadd.f32 %v467, %v550
  %v552 = vpop.f32.mrf.mxu0
  %553 = vmatprep.mubr.f32.mxu0 0.0
  %554 = vmatmul.mubr.f32.gmra.mxu0 %v434
  %v555 = vpop.f32.mrf.mxu0
  %v556 = vadd.f32 %v467, %v555
  %v557 = vpop.f32.mrf.mxu0
  %558 = vmatprep.mubr.f32.mxu0 0.0
  %559 = vmatmul.mubr.f32.gmra.mxu0 %v435
  %v560 = vpop.f32.mrf.mxu0
  %v561 = vadd.f32 %v467, %v560
  %v562 = vpop.f32.mrf.mxu0
  %563 = vmatprep.mubr.f32.mxu0 0.0
  %564 = vmatmul.mubr.f32.gmra.mxu0 %v436
  %v565 = vpop.f32.mrf.mxu0
  %v566 = vadd.f32 %v467, %v565
  %v567 = vpop.f32.mrf.mxu0
  %568 = vmatprep.mubr.f32.mxu0 0.0
  %569 = vmatmul.mubr.f32.gmra.mxu0 %v437
  %v570 = vpop.f32.mrf.mxu0
  %v571 = vadd.f32 %v467, %v570
  %v572 = vpop.f32.mrf.mxu0
  %573 = vmatprep.mubr.f32.mxu0 0.0
  %574 = vmatmul.mubr.f32.gmra.mxu0 %v438
  %v575 = vpop.f32.mrf.mxu0
  %v576 = vadd.f32 %v467, %v575
  %v577 = vpop.f32.mrf.mxu0
  %578 = vmatprep.mubr.f32.mxu0 0.0
  %579 = vmatmul.mubr.f32.gmra.mxu0 %v439
  %v580 = vpop.f32.mrf.mxu0
  %v581 = vadd.f32 %v467, %v580
  %v582 = vpop.f32.mrf.mxu0
  %583 = vmatprep.mubr.f32.mxu0 0.0
  %584 = vmatmul.mubr.f32.gmra.mxu0 %v440
  %v585 = vpop.f32.mrf.mxu0
  %v586 = vadd.f32 %v467, %v585
  %v587 = vpop.f32.mrf.mxu0
  %588 = vmatprep.mubr.f32.mxu0 0.0
  %589 = vmatmul.mubr.f32.gmra.mxu0 %v441
  %v590 = vpop.f32.mrf.mxu0
  %v591 = vadd.f32 %v467, %v590
  %v592 = vpop.f32.mrf.mxu0
  %593 = vmatprep.mubr.f32.mxu0 0.0
  %594 = vmatmul.mubr.f32.gmra.mxu0 %v442
  %v595 = vpop.f32.mrf.mxu0
  %v596 = vadd.f32 %v467, %v595
  %v597 = vpop.f32.mrf.mxu0
  %598 = vmatprep.mubr.f32.mxu0 0.0
  %599 = vmatmul.mubr.f32.gmra.mxu0 %v443
  %v600 = vpop.f32.mrf.mxu0
  %v601 = vadd.f32 %v467, %v600
  %v602 = vpop.f32.mrf.mxu0
  %603 = vmatprep.mubr.f32.mxu0 0.0
  %604 = vmatmul.mubr.f32.gmra.mxu0 %v444
  %v605 = vpop.f32.mrf.mxu0
  %v606 = vadd.f32 %v467, %v605
  %v607 = vpop.f32.mrf.mxu0
  %608 = vmatprep.mubr.f32.mxu0 0.0
  %609 = vmatmul.mubr.f32.gmra.mxu0 %v445
  %v610 = vpop.f32.mrf.mxu0
  %v611 = vadd.f32 %v467, %v610
  %v612 = vpop.f32.mrf.mxu0
  %613 = vdwg.mxu0
  %614 = vst [vmem:[%s8] sm:$0xff] %v536
  %615 = vst [vmem:[%s8 + $0x8] sm:$0xff] %v541
  %616 = vst [vmem:[%s8 + $0x10] sm:$0xff] %v546
  %617 = vst [vmem:[%s8 + $0x18] sm:$0xff] %v551
  %618 = vst [vmem:[%s8 + $0x20] sm:$0xff] %v556
  %619 = vst [vmem:[%s8 + $0x28] sm:$0xff] %v561
  %620 = vst [vmem:[%s8 + $0x30] sm:$0xff] %v566
  %621 = vst [vmem:[%s8 + $0x38] sm:$0xff] %v571
  %622 = vst [vmem:[%s8 + $0x40] sm:$0xff] %v576
  %623 = vst [vmem:[%s8 + $0x48] sm:$0xff] %v581
  %624 = vst [vmem:[%s8 + $0x50] sm:$0xff] %v586
  %625 = vst [vmem:[%s8 + $0x58] sm:$0xff] %v591
  %626 = vst [vmem:[%s8 + $0x60] sm:$0xff] %v596
  %627 = vst [vmem:[%s8 + $0x68] sm:$0xff] %v601
  %628 = vst [vmem:[%s8 + $0x70] sm:$0xff] %v606
  %629 = vst [vmem:[%s8 + $0x78] sm:$0xff] %v611
  // Predicated region
  $region33: #{gsn_sparse_forward.2} parent=0 // pred_check
    _
  $region34: #{gsn_sparse_forward.2} parent=0 // pred_check_branch
    %631 = sbr.rel (0) target = $region36
  $region35: #{gsn_sparse_forward.2} parent=0 // pred_region
    _
  $region36: #{gsn_sparse_forward.2} parent=0 // pred_fallthru
    _
  // Predicated region
  $region37: #{gsn_sparse_forward.2} parent=0 // pred_check
    _
  $region38: #{gsn_sparse_forward.2} parent=0 // pred_check_branch
    %633 = sbr.rel (0) target = $region40
  $region39: #{gsn_sparse_forward.2} parent=0 // pred_region
    _
  $region40: #{gsn_sparse_forward.2} parent=0 // pred_fallthru
    _

</llo_original>
